<compile_context>
chip_gen: v5e
topology: v5e:2x2
jax: 0.10.0
libtpu: 0.0.40
codegen_flags: <defaults>
</compile_context>

<pallas_src>
import numpy as np
import jax
import jax.numpy as jnp
from jax.experimental import pallas as pl
from jax.experimental.pallas import tpu as pltpu


# ---------------------------------------------------------------------------
# Fused kernel: all LSTM layers + FC head in one pallas_call (no grid)
# ---------------------------------------------------------------------------
def make_fused_lstm_fc_kernel(num_layers, hidden_units):
    H = hidden_units

    def kernel(*refs):
        # refs layout:
        #   x_ref, (w_ih, w_hh, b) * num_layers, wfc_ref, bfc_ref,
        #   o_ref, hseq_ref (scratch), gates_ref (scratch)
        x_ref = refs[0]
        layer_refs = refs[1:1 + 3 * num_layers]
        wfc_ref = refs[1 + 3 * num_layers]
        bfc_ref = refs[2 + 3 * num_layers]
        o_ref = refs[3 + 3 * num_layers]
        hseq_ref = refs[4 + 3 * num_layers]
        gates_ref = refs[5 + 3 * num_layers]

        S, B, _ = x_ref.shape
        zeros = jnp.zeros((B, H), jnp.float32)
        h_last = zeros

        for l in range(num_layers):
            w_ih = layer_refs[3 * l][...]        # (in_feat, 4H), g-cols pre-scaled x2
            w_hh = layer_refs[3 * l + 1][...]    # (H, 4H),      g-cols pre-scaled x2
            b = layer_refs[3 * l + 2][...]       # (1, 4H),      g-cols pre-scaled x2
            in_feat = w_ih.shape[0]

            # Hoisted input-to-hidden projection: one big MXU matmul (M = S*B),
            # bias folded in, result resident in VMEM scratch.
            if l == 0:
                xl = x_ref[...].reshape(S * B, in_feat)
            else:
                xl = hseq_ref[...].reshape(S * B, in_feat)
            gates_ref[...] = (
                jnp.dot(xl, w_ih, preferred_element_type=jnp.float32) + b
            ).reshape(S, B, 4 * H)

            write_hseq = l < num_layers - 1  # last layer only needs h_T

            def step(t, carry, w_hh=w_hh, write_hseq=write_hseq):
                h, c = carry
                # Serial critical path: only the small recurrent dot + nonlins.
                g_all = gates_ref[t] + jnp.dot(
                    h, w_hh, preferred_element_type=jnp.float32)
                # One sigmoid pass over the lane-dense (B, 4H) gates (EUP);
                # tanh(g) reconstructed as 2*sigmoid(2g) - 1 (g pre-scaled x2).
                sig = jax.nn.sigmoid(g_all)
                i_g = sig[:, 0 * H:1 * H]
                f_g = sig[:, 1 * H:2 * H]
                g_g = 2.0 * sig[:, 2 * H:3 * H] - 1.0
                o_g = sig[:, 3 * H:4 * H]
                c_new = f_g * c + i_g * g_g
                h_new = o_g * jnp.tanh(c_new)
                if write_hseq:
                    hseq_ref[t] = h_new
                return h_new, c_new

            h_last, _ = jax.lax.fori_loop(
                0, S, step, (zeros, zeros), unroll=min(int(S), 8))

        # Fused FC head on the last layer's final hidden state.
        o_ref[...] = (jnp.dot(h_last, wfc_ref[...],
                              preferred_element_type=jnp.float32)
                      + bfc_ref[...]).astype(o_ref.dtype)

    return kernel


# ---------------------------------------------------------------------------
# Wrapper
# ---------------------------------------------------------------------------
def lstm_network_forward(x_bsi, packed):
    """Full LSTMNetwork forward.  x_bsi: (batch, seq, input_size)."""
    x = jnp.transpose(x_bsi, (1, 0, 2)).astype(jnp.float32)  # -> (S, B, I)
    S, B, _ = x.shape
    layers = packed["layers"]
    num_layers = len(layers)
    H = layers[0][1].shape[0]          # w_hh: (H, 4H)
    O = packed["fc_w_t"].shape[1]

    kernel = make_fused_lstm_fc_kernel(num_layers, H)

    operands = [x]
    in_specs = [pl.BlockSpec(x.shape, lambda: (0, 0, 0))]
    for (w_ih, w_hh, b) in layers:
        operands += [w_ih, w_hh, b]
        in_specs += [pl.BlockSpec(w_ih.shape, lambda: (0, 0)),
                     pl.BlockSpec(w_hh.shape, lambda: (0, 0)),
                     pl.BlockSpec(b.shape, lambda: (0, 0))]
    operands += [packed["fc_w_t"], packed["fc_b"]]
    in_specs += [pl.BlockSpec(packed["fc_w_t"].shape, lambda: (0, 0)),
                 pl.BlockSpec(packed["fc_b"].shape, lambda: (0, 0))]

    return pl.pallas_call(
        kernel,
        out_shape=jax.ShapeDtypeStruct((B, O), jnp.float32),
        in_specs=in_specs,
        out_specs=pl.BlockSpec((B, O), lambda: (0, 0)),
        scratch_shapes=[
            pltpu.VMEM((S, B, H), jnp.float32),       # hidden sequence, layer l-1
            pltpu.VMEM((S, B, 4 * H), jnp.float32),   # hoisted input projections
        ],
    )(*operands)


# ---------------------------------------------------------------------------
# PyTorch-style raw parameters (uniform(-1/sqrt(H), 1/sqrt(H)))
# ---------------------------------------------------------------------------
def init_raw_params(key, input_size, hidden_units, num_layers, output_size):
    k = 1.0 / np.sqrt(hidden_units)
    H = hidden_units
    raw = {"layers": []}
    for layer in range(num_layers):
        in_feat = input_size if layer == 0 else H
        key, k1, k2, k3, k4 = jax.random.split(key, 5)
        w_ih = jax.random.uniform(k1, (4 * H, in_feat), jnp.float32, -k, k)
        w_hh = jax.random.uniform(k2, (4 * H, H), jnp.float32, -k, k)
        b_ih = jax.random.uniform(k3, (4 * H,), jnp.float32, -k, k)
        b_hh = jax.random.uniform(k4, (4 * H,), jnp.float32, -k, k)
        raw["layers"].append((w_ih, w_hh, b_ih, b_hh))
    key, k5, k6 = jax.random.split(key, 3)
    raw["fc_w"] = jax.random.uniform(k5, (output_size, H), jnp.float32, -k, k)
    raw["fc_b"] = jax.random.uniform(k6, (output_size,), jnp.float32, -k, k)
    return raw


# ---------------------------------------------------------------------------
# Pack for the kernel: transpose weights, fold b_ih+b_hh, and pre-scale the
# g-gate columns by 2 so the kernel can use tanh(g) = 2*sigmoid(2g) - 1.
# ---------------------------------------------------------------------------
def pack_params(raw):
    packed = {"layers": []}
    for (w_ih, w_hh, b_ih, b_hh) in raw["layers"]:
        H = w_hh.shape[1]
        scale = jnp.ones((4 * H, 1), jnp.float32).at[2 * H:3 * H].set(2.0)
        packed["layers"].append(
            ((w_ih * scale).T,                                   # (in_feat, 4H)
             (w_hh * scale).T,                                   # (H, 4H)
             ((b_ih + b_hh) * scale[:, 0]).reshape(1, 4 * H)))   # (1, 4H)
    packed["fc_w_t"] = raw["fc_w"].T
    packed["fc_b"] = raw["fc_b"].reshape(1, -1)
    return packed


# ---------------------------------------------------------------------------
# Pure-JAX reference (standard LSTM math on raw params, for correctness check)
# ---------------------------------------------------------------------------
def reference_forward(x_bsi, raw):
    seq = jnp.transpose(x_bsi, (1, 0, 2)).astype(jnp.float32)  # (S, B, I)
    B = seq.shape[1]
    for (w_ih, w_hh, b_ih, b_hh) in raw["layers"]:
        H = w_hh.shape[1]
        b = b_ih + b_hh

        def step(carry, x_t, w_ih=w_ih, w_hh=w_hh, b=b, H=H):
            h, c = carry
            gates = x_t @ w_ih.T + h @ w_hh.T + b
            i = jax.nn.sigmoid(gates[:, 0 * H:1 * H])
            f = jax.nn.sigmoid(gates[:, 1 * H:2 * H])
            g = jnp.tanh(gates[:, 2 * H:3 * H])
            o = jax.nn.sigmoid(gates[:, 3 * H:4 * H])
            c = f * c + i * g
            h = o * jnp.tanh(c)
            return (h, c), h

        init = (jnp.zeros((B, H), jnp.float32), jnp.zeros((B, H), jnp.float32))
        _, hs = jax.lax.scan(step, init, seq)
        seq = hs
    return seq[-1] @ raw["fc_w"].T + raw["fc_b"]


# ---------------------------------------------------------------------------
if __name__ == "__main__":
    batch, seq_len, input_size = 8, 8, 16
    hidden_units, num_layers, output_size = 32, 2, 4

    key = jax.random.PRNGKey(0)
    key, xkey = jax.random.split(key)
    x = jax.random.normal(xkey, (batch, seq_len, input_size), jnp.float32)

    raw = init_raw_params(key, input_size, hidden_units, num_layers, output_size)
    packed = pack_params(raw)

    out = jax.block_until_ready(lstm_network_forward(x, packed))
    ref = jax.block_until_ready(reference_forward(x, raw))

    assert out.shape == (batch, output_size)
    np.testing.assert_allclose(np.asarray(out), np.asarray(ref),
                               rtol=3e-4, atol=1e-4)
    print("KERNEL_OK")
</pallas_src>

<mosaic_0001>
module attributes {stable_mosaic.version = 11 : i64} {
  func.func @kernel(%arg0: memref<8x8x16xf32, #tpu.memory_space<vmem>>, %arg1: memref<16x128xf32, #tpu.memory_space<vmem>>, %arg2: memref<32x128xf32, #tpu.memory_space<vmem>>, %arg3: memref<1x128xf32, #tpu.memory_space<vmem>>, %arg4: memref<32x128xf32, #tpu.memory_space<vmem>>, %arg5: memref<32x128xf32, #tpu.memory_space<vmem>>, %arg6: memref<1x128xf32, #tpu.memory_space<vmem>>, %arg7: memref<32x4xf32, #tpu.memory_space<vmem>>, %arg8: memref<1x4xf32, #tpu.memory_space<vmem>>, %arg9: memref<8x4xf32, #tpu.memory_space<vmem>>, %arg10: memref<8x8x32xf32, #tpu.memory_space<vmem>>, %arg11: memref<8x8x128xf32, #tpu.memory_space<vmem>>) attributes {dimension_semantics = [], scalar_prefetch = 0 : i64, scratch_operands = 2 : i64, tpu.core_type = #tpu.core_type<tc>} {
    %cst = arith.constant 0.000000e+00 : f32
    %0 = vector.broadcast %cst : f32 to vector<8x32xf32>
    %c0 = arith.constant 0 : index
    %c0_0 = arith.constant 0 : index
    %1 = vector.load %arg1[%c0, %c0_0] : memref<16x128xf32, #tpu.memory_space<vmem>>, vector<16x128xf32>
    %c0_1 = arith.constant 0 : index
    %c0_2 = arith.constant 0 : index
    %2 = vector.load %arg2[%c0_1, %c0_2] : memref<32x128xf32, #tpu.memory_space<vmem>>, vector<32x128xf32>
    %c0_3 = arith.constant 0 : index
    %c0_4 = arith.constant 0 : index
    %3 = vector.load %arg3[%c0_3, %c0_4] : memref<1x128xf32, #tpu.memory_space<vmem>>, vector<1x128xf32>
    %c0_5 = arith.constant 0 : index
    %c0_6 = arith.constant 0 : index
    %c0_7 = arith.constant 0 : index
    %4 = vector.load %arg0[%c0_5, %c0_6, %c0_7] : memref<8x8x16xf32, #tpu.memory_space<vmem>>, vector<8x8x16xf32>
    %5 = vector.shape_cast %4 : vector<8x8x16xf32> to vector<64x16xf32>
    %cst_8 = arith.constant dense<0.000000e+00> : vector<64x128xf32>
    %6 = tpu.matmul %5, %1, %cst_8 {dimension_numbers = #tpu.dot_dimension_numbers<[1], [0], [0], [1], [0, 0, 1, 1], [], []>} : vector<64x16xf32>, vector<16x128xf32>, vector<64x128xf32> -> vector<64x128xf32>
    %7 = vector.broadcast %3 : vector<1x128xf32> to vector<64x128xf32>
    %8 = arith.addf %6, %7 : vector<64x128xf32>
    %9 = vector.shape_cast %8 : vector<64x128xf32> to vector<8x8x128xf32>
    %c0_9 = arith.constant 0 : index
    %c0_10 = arith.constant 0 : index
    %c0_11 = arith.constant 0 : index
    %10 = vector.load %arg11[%c0_9, %c0_10, %c0_11] : memref<8x8x128xf32, #tpu.memory_space<vmem>>, vector<8x8x128xf32>
    tpu.vector_store %arg11[%c0_9, %c0_10, %c0_11], %9 {strides = array<i32>} : memref<8x8x128xf32, #tpu.memory_space<vmem>>, vector<8x8x128xf32>,
    %c0_i32 = arith.constant 0 : i32
    %11 = arith.index_cast %c0_i32 : i32 to index
    %c0_12 = arith.constant 0 : index
    %c0_13 = arith.constant 0 : index
    %12 = vector.load %arg11[%11, %c0_12, %c0_13] : memref<8x8x128xf32, #tpu.memory_space<vmem>>, vector<1x8x128xf32>
    %13 = vector.shape_cast %12 : vector<1x8x128xf32> to vector<8x128xf32>
    %cst_14 = arith.constant dense<0.000000e+00> : vector<8x128xf32>
    %14 = tpu.matmul %0, %2, %cst_14 {dimension_numbers = #tpu.dot_dimension_numbers<[1], [0], [0], [1], [0, 0, 1, 1], [], []>} : vector<8x32xf32>, vector<32x128xf32>, vector<8x128xf32> -> vector<8x128xf32>
    %15 = arith.addf %13, %14 : vector<8x128xf32>
    %16 = arith.negf %15 : vector<8x128xf32>
    %17 = math.exp %16 : vector<8x128xf32>
    %cst_15 = arith.constant 1.000000e+00 : f32
    %18 = vector.broadcast %cst_15 : f32 to vector<8x128xf32>
    %19 = arith.addf %18, %17 : vector<8x128xf32>
    %20 = arith.divf %18, %19 : vector<8x128xf32>
    %21 = vector.extract_strided_slice %20 {offsets = [0, 0], sizes = [8, 32], strides = [1, 1]} : vector<8x128xf32> to vector<8x32xf32>
    %22 = vector.extract_strided_slice %20 {offsets = [0, 32], sizes = [8, 32], strides = [1, 1]} : vector<8x128xf32> to vector<8x32xf32>
    %23 = vector.extract_strided_slice %20 {offsets = [0, 64], sizes = [8, 32], strides = [1, 1]} : vector<8x128xf32> to vector<8x32xf32>
    %cst_16 = arith.constant 2.000000e+00 : f32
    %24 = vector.broadcast %cst_16 : f32 to vector<8x32xf32>
    %25 = arith.mulf %24, %23 : vector<8x32xf32>
    %cst_17 = arith.constant 1.000000e+00 : f32
    %26 = vector.broadcast %cst_17 : f32 to vector<8x32xf32>
    %27 = arith.subf %25, %26 : vector<8x32xf32>
    %28 = vector.extract_strided_slice %20 {offsets = [0, 96], sizes = [8, 32], strides = [1, 1]} : vector<8x128xf32> to vector<8x32xf32>
    %29 = arith.mulf %22, %0 : vector<8x32xf32>
    %30 = arith.mulf %21, %27 : vector<8x32xf32>
    %31 = arith.addf %29, %30 : vector<8x32xf32>
    %32 = math.tanh %31 : vector<8x32xf32>
    %33 = arith.mulf %28, %32 : vector<8x32xf32>
    %34 = arith.index_cast %c0_i32 : i32 to index
    %c0_18 = arith.constant 0 : index
    %c0_19 = arith.constant 0 : index
    %35 = vector.load %arg10[%34, %c0_18, %c0_19] : memref<8x8x32xf32, #tpu.memory_space<vmem>>, vector<1x8x32xf32>
    %36 = vector.shape_cast %35 : vector<1x8x32xf32> to vector<8x32xf32>
    %37 = vector.shape_cast %33 : vector<8x32xf32> to vector<1x8x32xf32>
    tpu.vector_store %arg10[%34, %c0_18, %c0_19], %37 {strides = array<i32>} : memref<8x8x32xf32, #tpu.memory_space<vmem>>, vector<1x8x32xf32>,
    %c1_i32 = arith.constant 1 : i32
    %38 = arith.index_cast %c1_i32 : i32 to index
    %c0_20 = arith.constant 0 : index
    %c0_21 = arith.constant 0 : index
    %39 = vector.load %arg11[%38, %c0_20, %c0_21] : memref<8x8x128xf32, #tpu.memory_space<vmem>>, vector<1x8x128xf32>
    %40 = vector.shape_cast %39 : vector<1x8x128xf32> to vector<8x128xf32>
    %cst_22 = arith.constant dense<0.000000e+00> : vector<8x128xf32>
    %41 = tpu.matmul %33, %2, %cst_22 {dimension_numbers = #tpu.dot_dimension_numbers<[1], [0], [0], [1], [0, 0, 1, 1], [], []>} : vector<8x32xf32>, vector<32x128xf32>, vector<8x128xf32> -> vector<8x128xf32>
    %42 = arith.addf %40, %41 : vector<8x128xf32>
    %43 = arith.negf %42 : vector<8x128xf32>
    %44 = math.exp %43 : vector<8x128xf32>
    %cst_23 = arith.constant 1.000000e+00 : f32
    %45 = vector.broadcast %cst_23 : f32 to vector<8x128xf32>
    %46 = arith.addf %45, %44 : vector<8x128xf32>
    %47 = arith.divf %45, %46 : vector<8x128xf32>
    %48 = vector.extract_strided_slice %47 {offsets = [0, 0], sizes = [8, 32], strides = [1, 1]} : vector<8x128xf32> to vector<8x32xf32>
    %49 = vector.extract_strided_slice %47 {offsets = [0, 32], sizes = [8, 32], strides = [1, 1]} : vector<8x128xf32> to vector<8x32xf32>
    %50 = vector.extract_strided_slice %47 {offsets = [0, 64], sizes = [8, 32], strides = [1, 1]} : vector<8x128xf32> to vector<8x32xf32>
    %cst_24 = arith.constant 2.000000e+00 : f32
    %51 = vector.broadcast %cst_24 : f32 to vector<8x32xf32>
    %52 = arith.mulf %51, %50 : vector<8x32xf32>
    %cst_25 = arith.constant 1.000000e+00 : f32
    %53 = vector.broadcast %cst_25 : f32 to vector<8x32xf32>
    %54 = arith.subf %52, %53 : vector<8x32xf32>
    %55 = vector.extract_strided_slice %47 {offsets = [0, 96], sizes = [8, 32], strides = [1, 1]} : vector<8x128xf32> to vector<8x32xf32>
    %56 = arith.mulf %49, %31 : vector<8x32xf32>
    %57 = arith.mulf %48, %54 : vector<8x32xf32>
    %58 = arith.addf %56, %57 : vector<8x32xf32>
    %59 = math.tanh %58 : vector<8x32xf32>
    %60 = arith.mulf %55, %59 : vector<8x32xf32>
    %61 = arith.index_cast %c1_i32 : i32 to index
    %c0_26 = arith.constant 0 : index
    %c0_27 = arith.constant 0 : index
    %62 = vector.load %arg10[%61, %c0_26, %c0_27] : memref<8x8x32xf32, #tpu.memory_space<vmem>>, vector<1x8x32xf32>
    %63 = vector.shape_cast %62 : vector<1x8x32xf32> to vector<8x32xf32>
    %64 = vector.shape_cast %60 : vector<8x32xf32> to vector<1x8x32xf32>
    tpu.vector_store %arg10[%61, %c0_26, %c0_27], %64 {strides = array<i32>} : memref<8x8x32xf32, #tpu.memory_space<vmem>>, vector<1x8x32xf32>,
    %c2_i32 = arith.constant 2 : i32
    %65 = arith.index_cast %c2_i32 : i32 to index
    %c0_28 = arith.constant 0 : index
    %c0_29 = arith.constant 0 : index
    %66 = vector.load %arg11[%65, %c0_28, %c0_29] : memref<8x8x128xf32, #tpu.memory_space<vmem>>, vector<1x8x128xf32>
    %67 = vector.shape_cast %66 : vector<1x8x128xf32> to vector<8x128xf32>
    %cst_30 = arith.constant dense<0.000000e+00> : vector<8x128xf32>
    %68 = tpu.matmul %60, %2, %cst_30 {dimension_numbers = #tpu.dot_dimension_numbers<[1], [0], [0], [1], [0, 0, 1, 1], [], []>} : vector<8x32xf32>, vector<32x128xf32>, vector<8x128xf32> -> vector<8x128xf32>
    %69 = arith.addf %67, %68 : vector<8x128xf32>
    %70 = arith.negf %69 : vector<8x128xf32>
    %71 = math.exp %70 : vector<8x128xf32>
    %cst_31 = arith.constant 1.000000e+00 : f32
    %72 = vector.broadcast %cst_31 : f32 to vector<8x128xf32>
    %73 = arith.addf %72, %71 : vector<8x128xf32>
    %74 = arith.divf %72, %73 : vector<8x128xf32>
    %75 = vector.extract_strided_slice %74 {offsets = [0, 0], sizes = [8, 32], strides = [1, 1]} : vector<8x128xf32> to vector<8x32xf32>
    %76 = vector.extract_strided_slice %74 {offsets = [0, 32], sizes = [8, 32], strides = [1, 1]} : vector<8x128xf32> to vector<8x32xf32>
    %77 = vector.extract_strided_slice %74 {offsets = [0, 64], sizes = [8, 32], strides = [1, 1]} : vector<8x128xf32> to vector<8x32xf32>
    %cst_32 = arith.constant 2.000000e+00 : f32
    %78 = vector.broadcast %cst_32 : f32 to vector<8x32xf32>
    %79 = arith.mulf %78, %77 : vector<8x32xf32>
    %cst_33 = arith.constant 1.000000e+00 : f32
    %80 = vector.broadcast %cst_33 : f32 to vector<8x32xf32>
    %81 = arith.subf %79, %80 : vector<8x32xf32>
    %82 = vector.extract_strided_slice %74 {offsets = [0, 96], sizes = [8, 32], strides = [1, 1]} : vector<8x128xf32> to vector<8x32xf32>
    %83 = arith.mulf %76, %58 : vector<8x32xf32>
    %84 = arith.mulf %75, %81 : vector<8x32xf32>
    %85 = arith.addf %83, %84 : vector<8x32xf32>
    %86 = math.tanh %85 : vector<8x32xf32>
    %87 = arith.mulf %82, %86 : vector<8x32xf32>
    %88 = arith.index_cast %c2_i32 : i32 to index
    %c0_34 = arith.constant 0 : index
    %c0_35 = arith.constant 0 : index
    %89 = vector.load %arg10[%88, %c0_34, %c0_35] : memref<8x8x32xf32, #tpu.memory_space<vmem>>, vector<1x8x32xf32>
    %90 = vector.shape_cast %89 : vector<1x8x32xf32> to vector<8x32xf32>
    %91 = vector.shape_cast %87 : vector<8x32xf32> to vector<1x8x32xf32>
    tpu.vector_store %arg10[%88, %c0_34, %c0_35], %91 {strides = array<i32>} : memref<8x8x32xf32, #tpu.memory_space<vmem>>, vector<1x8x32xf32>,
    %c3_i32 = arith.constant 3 : i32
    %92 = arith.index_cast %c3_i32 : i32 to index
    %c0_36 = arith.constant 0 : index
    %c0_37 = arith.constant 0 : index
    %93 = vector.load %arg11[%92, %c0_36, %c0_37] : memref<8x8x128xf32, #tpu.memory_space<vmem>>, vector<1x8x128xf32>
    %94 = vector.shape_cast %93 : vector<1x8x128xf32> to vector<8x128xf32>
    %cst_38 = arith.constant dense<0.000000e+00> : vector<8x128xf32>
    %95 = tpu.matmul %87, %2, %cst_38 {dimension_numbers = #tpu.dot_dimension_numbers<[1], [0], [0], [1], [0, 0, 1, 1], [], []>} : vector<8x32xf32>, vector<32x128xf32>, vector<8x128xf32> -> vector<8x128xf32>
    %96 = arith.addf %94, %95 : vector<8x128xf32>
    %97 = arith.negf %96 : vector<8x128xf32>
    %98 = math.exp %97 : vector<8x128xf32>
    %cst_39 = arith.constant 1.000000e+00 : f32
    %99 = vector.broadcast %cst_39 : f32 to vector<8x128xf32>
    %100 = arith.addf %99, %98 : vector<8x128xf32>
    %101 = arith.divf %99, %100 : vector<8x128xf32>
    %102 = vector.extract_strided_slice %101 {offsets = [0, 0], sizes = [8, 32], strides = [1, 1]} : vector<8x128xf32> to vector<8x32xf32>
    %103 = vector.extract_strided_slice %101 {offsets = [0, 32], sizes = [8, 32], strides = [1, 1]} : vector<8x128xf32> to vector<8x32xf32>
    %104 = vector.extract_strided_slice %101 {offsets = [0, 64], sizes = [8, 32], strides = [1, 1]} : vector<8x128xf32> to vector<8x32xf32>
    %cst_40 = arith.constant 2.000000e+00 : f32
    %105 = vector.broadcast %cst_40 : f32 to vector<8x32xf32>
    %106 = arith.mulf %105, %104 : vector<8x32xf32>
    %cst_41 = arith.constant 1.000000e+00 : f32
    %107 = vector.broadcast %cst_41 : f32 to vector<8x32xf32>
    %108 = arith.subf %106, %107 : vector<8x32xf32>
    %109 = vector.extract_strided_slice %101 {offsets = [0, 96], sizes = [8, 32], strides = [1, 1]} : vector<8x128xf32> to vector<8x32xf32>
    %110 = arith.mulf %103, %85 : vector<8x32xf32>
    %111 = arith.mulf %102, %108 : vector<8x32xf32>
    %112 = arith.addf %110, %111 : vector<8x32xf32>
    %113 = math.tanh %112 : vector<8x32xf32>
    %114 = arith.mulf %109, %113 : vector<8x32xf32>
    %115 = arith.index_cast %c3_i32 : i32 to index
    %c0_42 = arith.constant 0 : index
    %c0_43 = arith.constant 0 : index
    %116 = vector.load %arg10[%115, %c0_42, %c0_43] : memref<8x8x32xf32, #tpu.memory_space<vmem>>, vector<1x8x32xf32>
    %117 = vector.shape_cast %116 : vector<1x8x32xf32> to vector<8x32xf32>
    %118 = vector.shape_cast %114 : vector<8x32xf32> to vector<1x8x32xf32>
    tpu.vector_store %arg10[%115, %c0_42, %c0_43], %118 {strides = array<i32>} : memref<8x8x32xf32, #tpu.memory_space<vmem>>, vector<1x8x32xf32>,
    %c4_i32 = arith.constant 4 : i32
    %119 = arith.index_cast %c4_i32 : i32 to index
    %c0_44 = arith.constant 0 : index
    %c0_45 = arith.constant 0 : index
    %120 = vector.load %arg11[%119, %c0_44, %c0_45] : memref<8x8x128xf32, #tpu.memory_space<vmem>>, vector<1x8x128xf32>
    %121 = vector.shape_cast %120 : vector<1x8x128xf32> to vector<8x128xf32>
    %cst_46 = arith.constant dense<0.000000e+00> : vector<8x128xf32>
    %122 = tpu.matmul %114, %2, %cst_46 {dimension_numbers = #tpu.dot_dimension_numbers<[1], [0], [0], [1], [0, 0, 1, 1], [], []>} : vector<8x32xf32>, vector<32x128xf32>, vector<8x128xf32> -> vector<8x128xf32>
    %123 = arith.addf %121, %122 : vector<8x128xf32>
    %124 = arith.negf %123 : vector<8x128xf32>
    %125 = math.exp %124 : vector<8x128xf32>
    %cst_47 = arith.constant 1.000000e+00 : f32
    %126 = vector.broadcast %cst_47 : f32 to vector<8x128xf32>
    %127 = arith.addf %126, %125 : vector<8x128xf32>
    %128 = arith.divf %126, %127 : vector<8x128xf32>
    %129 = vector.extract_strided_slice %128 {offsets = [0, 0], sizes = [8, 32], strides = [1, 1]} : vector<8x128xf32> to vector<8x32xf32>
    %130 = vector.extract_strided_slice %128 {offsets = [0, 32], sizes = [8, 32], strides = [1, 1]} : vector<8x128xf32> to vector<8x32xf32>
    %131 = vector.extract_strided_slice %128 {offsets = [0, 64], sizes = [8, 32], strides = [1, 1]} : vector<8x128xf32> to vector<8x32xf32>
    %cst_48 = arith.constant 2.000000e+00 : f32
    %132 = vector.broadcast %cst_48 : f32 to vector<8x32xf32>
    %133 = arith.mulf %132, %131 : vector<8x32xf32>
    %cst_49 = arith.constant 1.000000e+00 : f32
    %134 = vector.broadcast %cst_49 : f32 to vector<8x32xf32>
    %135 = arith.subf %133, %134 : vector<8x32xf32>
    %136 = vector.extract_strided_slice %128 {offsets = [0, 96], sizes = [8, 32], strides = [1, 1]} : vector<8x128xf32> to vector<8x32xf32>
    %137 = arith.mulf %130, %112 : vector<8x32xf32>
    %138 = arith.mulf %129, %135 : vector<8x32xf32>
    %139 = arith.addf %137, %138 : vector<8x32xf32>
    %140 = math.tanh %139 : vector<8x32xf32>
    %141 = arith.mulf %136, %140 : vector<8x32xf32>
    %142 = arith.index_cast %c4_i32 : i32 to index
    %c0_50 = arith.constant 0 : index
    %c0_51 = arith.constant 0 : index
    %143 = vector.load %arg10[%142, %c0_50, %c0_51] : memref<8x8x32xf32, #tpu.memory_space<vmem>>, vector<1x8x32xf32>
    %144 = vector.shape_cast %143 : vector<1x8x32xf32> to vector<8x32xf32>
    %145 = vector.shape_cast %141 : vector<8x32xf32> to vector<1x8x32xf32>
    tpu.vector_store %arg10[%142, %c0_50, %c0_51], %145 {strides = array<i32>} : memref<8x8x32xf32, #tpu.memory_space<vmem>>, vector<1x8x32xf32>,
    %c5_i32 = arith.constant 5 : i32
    %146 = arith.index_cast %c5_i32 : i32 to index
    %c0_52 = arith.constant 0 : index
    %c0_53 = arith.constant 0 : index
    %147 = vector.load %arg11[%146, %c0_52, %c0_53] : memref<8x8x128xf32, #tpu.memory_space<vmem>>, vector<1x8x128xf32>
    %148 = vector.shape_cast %147 : vector<1x8x128xf32> to vector<8x128xf32>
    %cst_54 = arith.constant dense<0.000000e+00> : vector<8x128xf32>
    %149 = tpu.matmul %141, %2, %cst_54 {dimension_numbers = #tpu.dot_dimension_numbers<[1], [0], [0], [1], [0, 0, 1, 1], [], []>} : vector<8x32xf32>, vector<32x128xf32>, vector<8x128xf32> -> vector<8x128xf32>
    %150 = arith.addf %148, %149 : vector<8x128xf32>
    %151 = arith.negf %150 : vector<8x128xf32>
    %152 = math.exp %151 : vector<8x128xf32>
    %cst_55 = arith.constant 1.000000e+00 : f32
    %153 = vector.broadcast %cst_55 : f32 to vector<8x128xf32>
    %154 = arith.addf %153, %152 : vector<8x128xf32>
    %155 = arith.divf %153, %154 : vector<8x128xf32>
    %156 = vector.extract_strided_slice %155 {offsets = [0, 0], sizes = [8, 32], strides = [1, 1]} : vector<8x128xf32> to vector<8x32xf32>
    %157 = vector.extract_strided_slice %155 {offsets = [0, 32], sizes = [8, 32], strides = [1, 1]} : vector<8x128xf32> to vector<8x32xf32>
    %158 = vector.extract_strided_slice %155 {offsets = [0, 64], sizes = [8, 32], strides = [1, 1]} : vector<8x128xf32> to vector<8x32xf32>
    %cst_56 = arith.constant 2.000000e+00 : f32
    %159 = vector.broadcast %cst_56 : f32 to vector<8x32xf32>
    %160 = arith.mulf %159, %158 : vector<8x32xf32>
    %cst_57 = arith.constant 1.000000e+00 : f32
    %161 = vector.broadcast %cst_57 : f32 to vector<8x32xf32>
    %162 = arith.subf %160, %161 : vector<8x32xf32>
    %163 = vector.extract_strided_slice %155 {offsets = [0, 96], sizes = [8, 32], strides = [1, 1]} : vector<8x128xf32> to vector<8x32xf32>
    %164 = arith.mulf %157, %139 : vector<8x32xf32>
    %165 = arith.mulf %156, %162 : vector<8x32xf32>
    %166 = arith.addf %164, %165 : vector<8x32xf32>
    %167 = math.tanh %166 : vector<8x32xf32>
    %168 = arith.mulf %163, %167 : vector<8x32xf32>
    %169 = arith.index_cast %c5_i32 : i32 to index
    %c0_58 = arith.constant 0 : index
    %c0_59 = arith.constant 0 : index
    %170 = vector.load %arg10[%169, %c0_58, %c0_59] : memref<8x8x32xf32, #tpu.memory_space<vmem>>, vector<1x8x32xf32>
    %171 = vector.shape_cast %170 : vector<1x8x32xf32> to vector<8x32xf32>
    %172 = vector.shape_cast %168 : vector<8x32xf32> to vector<1x8x32xf32>
    tpu.vector_store %arg10[%169, %c0_58, %c0_59], %172 {strides = array<i32>} : memref<8x8x32xf32, #tpu.memory_space<vmem>>, vector<1x8x32xf32>,
    %c6_i32 = arith.constant 6 : i32
    %173 = arith.index_cast %c6_i32 : i32 to index
    %c0_60 = arith.constant 0 : index
    %c0_61 = arith.constant 0 : index
    %174 = vector.load %arg11[%173, %c0_60, %c0_61] : memref<8x8x128xf32, #tpu.memory_space<vmem>>, vector<1x8x128xf32>
    %175 = vector.shape_cast %174 : vector<1x8x128xf32> to vector<8x128xf32>
    %cst_62 = arith.constant dense<0.000000e+00> : vector<8x128xf32>
    %176 = tpu.matmul %168, %2, %cst_62 {dimension_numbers = #tpu.dot_dimension_numbers<[1], [0], [0], [1], [0, 0, 1, 1], [], []>} : vector<8x32xf32>, vector<32x128xf32>, vector<8x128xf32> -> vector<8x128xf32>
    %177 = arith.addf %175, %176 : vector<8x128xf32>
    %178 = arith.negf %177 : vector<8x128xf32>
    %179 = math.exp %178 : vector<8x128xf32>
    %cst_63 = arith.constant 1.000000e+00 : f32
    %180 = vector.broadcast %cst_63 : f32 to vector<8x128xf32>
    %181 = arith.addf %180, %179 : vector<8x128xf32>
    %182 = arith.divf %180, %181 : vector<8x128xf32>
    %183 = vector.extract_strided_slice %182 {offsets = [0, 0], sizes = [8, 32], strides = [1, 1]} : vector<8x128xf32> to vector<8x32xf32>
    %184 = vector.extract_strided_slice %182 {offsets = [0, 32], sizes = [8, 32], strides = [1, 1]} : vector<8x128xf32> to vector<8x32xf32>
    %185 = vector.extract_strided_slice %182 {offsets = [0, 64], sizes = [8, 32], strides = [1, 1]} : vector<8x128xf32> to vector<8x32xf32>
    %cst_64 = arith.constant 2.000000e+00 : f32
    %186 = vector.broadcast %cst_64 : f32 to vector<8x32xf32>
    %187 = arith.mulf %186, %185 : vector<8x32xf32>
    %cst_65 = arith.constant 1.000000e+00 : f32
    %188 = vector.broadcast %cst_65 : f32 to vector<8x32xf32>
    %189 = arith.subf %187, %188 : vector<8x32xf32>
    %190 = vector.extract_strided_slice %182 {offsets = [0, 96], sizes = [8, 32], strides = [1, 1]} : vector<8x128xf32> to vector<8x32xf32>
    %191 = arith.mulf %184, %166 : vector<8x32xf32>
    %192 = arith.mulf %183, %189 : vector<8x32xf32>
    %193 = arith.addf %191, %192 : vector<8x32xf32>
    %194 = math.tanh %193 : vector<8x32xf32>
    %195 = arith.mulf %190, %194 : vector<8x32xf32>
    %196 = arith.index_cast %c6_i32 : i32 to index
    %c0_66 = arith.constant 0 : index
    %c0_67 = arith.constant 0 : index
    %197 = vector.load %arg10[%196, %c0_66, %c0_67] : memref<8x8x32xf32, #tpu.memory_space<vmem>>, vector<1x8x32xf32>
    %198 = vector.shape_cast %197 : vector<1x8x32xf32> to vector<8x32xf32>
    %199 = vector.shape_cast %195 : vector<8x32xf32> to vector<1x8x32xf32>
    tpu.vector_store %arg10[%196, %c0_66, %c0_67], %199 {strides = array<i32>} : memref<8x8x32xf32, #tpu.memory_space<vmem>>, vector<1x8x32xf32>,
    %c7_i32 = arith.constant 7 : i32
    %200 = arith.index_cast %c7_i32 : i32 to index
    %c0_68 = arith.constant 0 : index
    %c0_69 = arith.constant 0 : index
    %201 = vector.load %arg11[%200, %c0_68, %c0_69] : memref<8x8x128xf32, #tpu.memory_space<vmem>>, vector<1x8x128xf32>
    %202 = vector.shape_cast %201 : vector<1x8x128xf32> to vector<8x128xf32>
    %cst_70 = arith.constant dense<0.000000e+00> : vector<8x128xf32>
    %203 = tpu.matmul %195, %2, %cst_70 {dimension_numbers = #tpu.dot_dimension_numbers<[1], [0], [0], [1], [0, 0, 1, 1], [], []>} : vector<8x32xf32>, vector<32x128xf32>, vector<8x128xf32> -> vector<8x128xf32>
    %204 = arith.addf %202, %203 : vector<8x128xf32>
    %205 = arith.negf %204 : vector<8x128xf32>
    %206 = math.exp %205 : vector<8x128xf32>
    %cst_71 = arith.constant 1.000000e+00 : f32
    %207 = vector.broadcast %cst_71 : f32 to vector<8x128xf32>
    %208 = arith.addf %207, %206 : vector<8x128xf32>
    %209 = arith.divf %207, %208 : vector<8x128xf32>
    %210 = vector.extract_strided_slice %209 {offsets = [0, 0], sizes = [8, 32], strides = [1, 1]} : vector<8x128xf32> to vector<8x32xf32>
    %211 = vector.extract_strided_slice %209 {offsets = [0, 32], sizes = [8, 32], strides = [1, 1]} : vector<8x128xf32> to vector<8x32xf32>
    %212 = vector.extract_strided_slice %209 {offsets = [0, 64], sizes = [8, 32], strides = [1, 1]} : vector<8x128xf32> to vector<8x32xf32>
    %cst_72 = arith.constant 2.000000e+00 : f32
    %213 = vector.broadcast %cst_72 : f32 to vector<8x32xf32>
    %214 = arith.mulf %213, %212 : vector<8x32xf32>
    %cst_73 = arith.constant 1.000000e+00 : f32
    %215 = vector.broadcast %cst_73 : f32 to vector<8x32xf32>
    %216 = arith.subf %214, %215 : vector<8x32xf32>
    %217 = vector.extract_strided_slice %209 {offsets = [0, 96], sizes = [8, 32], strides = [1, 1]} : vector<8x128xf32> to vector<8x32xf32>
    %218 = arith.mulf %211, %193 : vector<8x32xf32>
    %219 = arith.mulf %210, %216 : vector<8x32xf32>
    %220 = arith.addf %218, %219 : vector<8x32xf32>
    %221 = math.tanh %220 : vector<8x32xf32>
    %222 = arith.mulf %217, %221 : vector<8x32xf32>
    %223 = arith.index_cast %c7_i32 : i32 to index
    %c0_74 = arith.constant 0 : index
    %c0_75 = arith.constant 0 : index
    %224 = vector.load %arg10[%223, %c0_74, %c0_75] : memref<8x8x32xf32, #tpu.memory_space<vmem>>, vector<1x8x32xf32>
    %225 = vector.shape_cast %224 : vector<1x8x32xf32> to vector<8x32xf32>
    %226 = vector.shape_cast %222 : vector<8x32xf32> to vector<1x8x32xf32>
    tpu.vector_store %arg10[%223, %c0_74, %c0_75], %226 {strides = array<i32>} : memref<8x8x32xf32, #tpu.memory_space<vmem>>, vector<1x8x32xf32>,
    %c8_i32 = arith.constant 8 : i32
    %c0_76 = arith.constant 0 : index
    %c0_77 = arith.constant 0 : index
    %227 = vector.load %arg4[%c0_76, %c0_77] : memref<32x128xf32, #tpu.memory_space<vmem>>, vector<32x128xf32>
    %c0_78 = arith.constant 0 : index
    %c0_79 = arith.constant 0 : index
    %228 = vector.load %arg5[%c0_78, %c0_79] : memref<32x128xf32, #tpu.memory_space<vmem>>, vector<32x128xf32>
    %c0_80 = arith.constant 0 : index
    %c0_81 = arith.constant 0 : index
    %229 = vector.load %arg6[%c0_80, %c0_81] : memref<1x128xf32, #tpu.memory_space<vmem>>, vector<1x128xf32>
    %c0_82 = arith.constant 0 : index
    %c0_83 = arith.constant 0 : index
    %c0_84 = arith.constant 0 : index
    %230 = vector.load %arg10[%c0_82, %c0_83, %c0_84] : memref<8x8x32xf32, #tpu.memory_space<vmem>>, vector<8x8x32xf32>
    %231 = vector.shape_cast %230 : vector<8x8x32xf32> to vector<64x32xf32>
    %cst_85 = arith.constant dense<0.000000e+00> : vector<64x128xf32>
    %232 = tpu.matmul %231, %227, %cst_85 {dimension_numbers = #tpu.dot_dimension_numbers<[1], [0], [0], [1], [0, 0, 1, 1], [], []>} : vector<64x32xf32>, vector<32x128xf32>, vector<64x128xf32> -> vector<64x128xf32>
    %233 = vector.broadcast %229 : vector<1x128xf32> to vector<64x128xf32>
    %234 = arith.addf %232, %233 : vector<64x128xf32>
    %235 = vector.shape_cast %234 : vector<64x128xf32> to vector<8x8x128xf32>
    %c0_86 = arith.constant 0 : index
    %c0_87 = arith.constant 0 : index
    %c0_88 = arith.constant 0 : index
    %236 = vector.load %arg11[%c0_86, %c0_87, %c0_88] : memref<8x8x128xf32, #tpu.memory_space<vmem>>, vector<8x8x128xf32>
    tpu.vector_store %arg11[%c0_86, %c0_87, %c0_88], %235 {strides = array<i32>} : memref<8x8x128xf32, #tpu.memory_space<vmem>>, vector<8x8x128xf32>,
    %c0_i32_89 = arith.constant 0 : i32
    %237 = arith.index_cast %c0_i32_89 : i32 to index
    %c0_90 = arith.constant 0 : index
    %c0_91 = arith.constant 0 : index
    %238 = vector.load %arg11[%237, %c0_90, %c0_91] : memref<8x8x128xf32, #tpu.memory_space<vmem>>, vector<1x8x128xf32>
    %239 = vector.shape_cast %238 : vector<1x8x128xf32> to vector<8x128xf32>
    %cst_92 = arith.constant dense<0.000000e+00> : vector<8x128xf32>
    %240 = tpu.matmul %0, %228, %cst_92 {dimension_numbers = #tpu.dot_dimension_numbers<[1], [0], [0], [1], [0, 0, 1, 1], [], []>} : vector<8x32xf32>, vector<32x128xf32>, vector<8x128xf32> -> vector<8x128xf32>
    %241 = arith.addf %239, %240 : vector<8x128xf32>
    %242 = arith.negf %241 : vector<8x128xf32>
    %243 = math.exp %242 : vector<8x128xf32>
    %cst_93 = arith.constant 1.000000e+00 : f32
    %244 = vector.broadcast %cst_93 : f32 to vector<8x128xf32>
    %245 = arith.addf %244, %243 : vector<8x128xf32>
    %246 = arith.divf %244, %245 : vector<8x128xf32>
    %247 = vector.extract_strided_slice %246 {offsets = [0, 0], sizes = [8, 32], strides = [1, 1]} : vector<8x128xf32> to vector<8x32xf32>
    %248 = vector.extract_strided_slice %246 {offsets = [0, 32], sizes = [8, 32], strides = [1, 1]} : vector<8x128xf32> to vector<8x32xf32>
    %249 = vector.extract_strided_slice %246 {offsets = [0, 64], sizes = [8, 32], strides = [1, 1]} : vector<8x128xf32> to vector<8x32xf32>
    %cst_94 = arith.constant 2.000000e+00 : f32
    %250 = vector.broadcast %cst_94 : f32 to vector<8x32xf32>
    %251 = arith.mulf %250, %249 : vector<8x32xf32>
    %cst_95 = arith.constant 1.000000e+00 : f32
    %252 = vector.broadcast %cst_95 : f32 to vector<8x32xf32>
    %253 = arith.subf %251, %252 : vector<8x32xf32>
    %254 = vector.extract_strided_slice %246 {offsets = [0, 96], sizes = [8, 32], strides = [1, 1]} : vector<8x128xf32> to vector<8x32xf32>
    %255 = arith.mulf %248, %0 : vector<8x32xf32>
    %256 = arith.mulf %247, %253 : vector<8x32xf32>
    %257 = arith.addf %255, %256 : vector<8x32xf32>
    %258 = math.tanh %257 : vector<8x32xf32>
    %259 = arith.mulf %254, %258 : vector<8x32xf32>
    %c1_i32_96 = arith.constant 1 : i32
    %260 = arith.index_cast %c1_i32_96 : i32 to index
    %c0_97 = arith.constant 0 : index
    %c0_98 = arith.constant 0 : index
    %261 = vector.load %arg11[%260, %c0_97, %c0_98] : memref<8x8x128xf32, #tpu.memory_space<vmem>>, vector<1x8x128xf32>
    %262 = vector.shape_cast %261 : vector<1x8x128xf32> to vector<8x128xf32>
    %cst_99 = arith.constant dense<0.000000e+00> : vector<8x128xf32>
    %263 = tpu.matmul %259, %228, %cst_99 {dimension_numbers = #tpu.dot_dimension_numbers<[1], [0], [0], [1], [0, 0, 1, 1], [], []>} : vector<8x32xf32>, vector<32x128xf32>, vector<8x128xf32> -> vector<8x128xf32>
    %264 = arith.addf %262, %263 : vector<8x128xf32>
    %265 = arith.negf %264 : vector<8x128xf32>
    %266 = math.exp %265 : vector<8x128xf32>
    %cst_100 = arith.constant 1.000000e+00 : f32
    %267 = vector.broadcast %cst_100 : f32 to vector<8x128xf32>
    %268 = arith.addf %267, %266 : vector<8x128xf32>
    %269 = arith.divf %267, %268 : vector<8x128xf32>
    %270 = vector.extract_strided_slice %269 {offsets = [0, 0], sizes = [8, 32], strides = [1, 1]} : vector<8x128xf32> to vector<8x32xf32>
    %271 = vector.extract_strided_slice %269 {offsets = [0, 32], sizes = [8, 32], strides = [1, 1]} : vector<8x128xf32> to vector<8x32xf32>
    %272 = vector.extract_strided_slice %269 {offsets = [0, 64], sizes = [8, 32], strides = [1, 1]} : vector<8x128xf32> to vector<8x32xf32>
    %cst_101 = arith.constant 2.000000e+00 : f32
    %273 = vector.broadcast %cst_101 : f32 to vector<8x32xf32>
    %274 = arith.mulf %273, %272 : vector<8x32xf32>
    %cst_102 = arith.constant 1.000000e+00 : f32
    %275 = vector.broadcast %cst_102 : f32 to vector<8x32xf32>
    %276 = arith.subf %274, %275 : vector<8x32xf32>
    %277 = vector.extract_strided_slice %269 {offsets = [0, 96], sizes = [8, 32], strides = [1, 1]} : vector<8x128xf32> to vector<8x32xf32>
    %278 = arith.mulf %271, %257 : vector<8x32xf32>
    %279 = arith.mulf %270, %276 : vector<8x32xf32>
    %280 = arith.addf %278, %279 : vector<8x32xf32>
    %281 = math.tanh %280 : vector<8x32xf32>
    %282 = arith.mulf %277, %281 : vector<8x32xf32>
    %c2_i32_103 = arith.constant 2 : i32
    %283 = arith.index_cast %c2_i32_103 : i32 to index
    %c0_104 = arith.constant 0 : index
    %c0_105 = arith.constant 0 : index
    %284 = vector.load %arg11[%283, %c0_104, %c0_105] : memref<8x8x128xf32, #tpu.memory_space<vmem>>, vector<1x8x128xf32>
    %285 = vector.shape_cast %284 : vector<1x8x128xf32> to vector<8x128xf32>
    %cst_106 = arith.constant dense<0.000000e+00> : vector<8x128xf32>
    %286 = tpu.matmul %282, %228, %cst_106 {dimension_numbers = #tpu.dot_dimension_numbers<[1], [0], [0], [1], [0, 0, 1, 1], [], []>} : vector<8x32xf32>, vector<32x128xf32>, vector<8x128xf32> -> vector<8x128xf32>
    %287 = arith.addf %285, %286 : vector<8x128xf32>
    %288 = arith.negf %287 : vector<8x128xf32>
    %289 = math.exp %288 : vector<8x128xf32>
    %cst_107 = arith.constant 1.000000e+00 : f32
    %290 = vector.broadcast %cst_107 : f32 to vector<8x128xf32>
    %291 = arith.addf %290, %289 : vector<8x128xf32>
    %292 = arith.divf %290, %291 : vector<8x128xf32>
    %293 = vector.extract_strided_slice %292 {offsets = [0, 0], sizes = [8, 32], strides = [1, 1]} : vector<8x128xf32> to vector<8x32xf32>
    %294 = vector.extract_strided_slice %292 {offsets = [0, 32], sizes = [8, 32], strides = [1, 1]} : vector<8x128xf32> to vector<8x32xf32>
    %295 = vector.extract_strided_slice %292 {offsets = [0, 64], sizes = [8, 32], strides = [1, 1]} : vector<8x128xf32> to vector<8x32xf32>
    %cst_108 = arith.constant 2.000000e+00 : f32
    %296 = vector.broadcast %cst_108 : f32 to vector<8x32xf32>
    %297 = arith.mulf %296, %295 : vector<8x32xf32>
    %cst_109 = arith.constant 1.000000e+00 : f32
    %298 = vector.broadcast %cst_109 : f32 to vector<8x32xf32>
    %299 = arith.subf %297, %298 : vector<8x32xf32>
    %300 = vector.extract_strided_slice %292 {offsets = [0, 96], sizes = [8, 32], strides = [1, 1]} : vector<8x128xf32> to vector<8x32xf32>
    %301 = arith.mulf %294, %280 : vector<8x32xf32>
    %302 = arith.mulf %293, %299 : vector<8x32xf32>
    %303 = arith.addf %301, %302 : vector<8x32xf32>
    %304 = math.tanh %303 : vector<8x32xf32>
    %305 = arith.mulf %300, %304 : vector<8x32xf32>
    %c3_i32_110 = arith.constant 3 : i32
    %306 = arith.index_cast %c3_i32_110 : i32 to index
    %c0_111 = arith.constant 0 : index
    %c0_112 = arith.constant 0 : index
    %307 = vector.load %arg11[%306, %c0_111, %c0_112] : memref<8x8x128xf32, #tpu.memory_space<vmem>>, vector<1x8x128xf32>
    %308 = vector.shape_cast %307 : vector<1x8x128xf32> to vector<8x128xf32>
    %cst_113 = arith.constant dense<0.000000e+00> : vector<8x128xf32>
    %309 = tpu.matmul %305, %228, %cst_113 {dimension_numbers = #tpu.dot_dimension_numbers<[1], [0], [0], [1], [0, 0, 1, 1], [], []>} : vector<8x32xf32>, vector<32x128xf32>, vector<8x128xf32> -> vector<8x128xf32>
    %310 = arith.addf %308, %309 : vector<8x128xf32>
    %311 = arith.negf %310 : vector<8x128xf32>
    %312 = math.exp %311 : vector<8x128xf32>
    %cst_114 = arith.constant 1.000000e+00 : f32
    %313 = vector.broadcast %cst_114 : f32 to vector<8x128xf32>
    %314 = arith.addf %313, %312 : vector<8x128xf32>
    %315 = arith.divf %313, %314 : vector<8x128xf32>
    %316 = vector.extract_strided_slice %315 {offsets = [0, 0], sizes = [8, 32], strides = [1, 1]} : vector<8x128xf32> to vector<8x32xf32>
    %317 = vector.extract_strided_slice %315 {offsets = [0, 32], sizes = [8, 32], strides = [1, 1]} : vector<8x128xf32> to vector<8x32xf32>
    %318 = vector.extract_strided_slice %315 {offsets = [0, 64], sizes = [8, 32], strides = [1, 1]} : vector<8x128xf32> to vector<8x32xf32>
    %cst_115 = arith.constant 2.000000e+00 : f32
    %319 = vector.broadcast %cst_115 : f32 to vector<8x32xf32>
    %320 = arith.mulf %319, %318 : vector<8x32xf32>
    %cst_116 = arith.constant 1.000000e+00 : f32
    %321 = vector.broadcast %cst_116 : f32 to vector<8x32xf32>
    %322 = arith.subf %320, %321 : vector<8x32xf32>
    %323 = vector.extract_strided_slice %315 {offsets = [0, 96], sizes = [8, 32], strides = [1, 1]} : vector<8x128xf32> to vector<8x32xf32>
    %324 = arith.mulf %317, %303 : vector<8x32xf32>
    %325 = arith.mulf %316, %322 : vector<8x32xf32>
    %326 = arith.addf %324, %325 : vector<8x32xf32>
    %327 = math.tanh %326 : vector<8x32xf32>
    %328 = arith.mulf %323, %327 : vector<8x32xf32>
    %c4_i32_117 = arith.constant 4 : i32
    %329 = arith.index_cast %c4_i32_117 : i32 to index
    %c0_118 = arith.constant 0 : index
    %c0_119 = arith.constant 0 : index
    %330 = vector.load %arg11[%329, %c0_118, %c0_119] : memref<8x8x128xf32, #tpu.memory_space<vmem>>, vector<1x8x128xf32>
    %331 = vector.shape_cast %330 : vector<1x8x128xf32> to vector<8x128xf32>
    %cst_120 = arith.constant dense<0.000000e+00> : vector<8x128xf32>
    %332 = tpu.matmul %328, %228, %cst_120 {dimension_numbers = #tpu.dot_dimension_numbers<[1], [0], [0], [1], [0, 0, 1, 1], [], []>} : vector<8x32xf32>, vector<32x128xf32>, vector<8x128xf32> -> vector<8x128xf32>
    %333 = arith.addf %331, %332 : vector<8x128xf32>
    %334 = arith.negf %333 : vector<8x128xf32>
    %335 = math.exp %334 : vector<8x128xf32>
    %cst_121 = arith.constant 1.000000e+00 : f32
    %336 = vector.broadcast %cst_121 : f32 to vector<8x128xf32>
    %337 = arith.addf %336, %335 : vector<8x128xf32>
    %338 = arith.divf %336, %337 : vector<8x128xf32>
    %339 = vector.extract_strided_slice %338 {offsets = [0, 0], sizes = [8, 32], strides = [1, 1]} : vector<8x128xf32> to vector<8x32xf32>
    %340 = vector.extract_strided_slice %338 {offsets = [0, 32], sizes = [8, 32], strides = [1, 1]} : vector<8x128xf32> to vector<8x32xf32>
    %341 = vector.extract_strided_slice %338 {offsets = [0, 64], sizes = [8, 32], strides = [1, 1]} : vector<8x128xf32> to vector<8x32xf32>
    %cst_122 = arith.constant 2.000000e+00 : f32
    %342 = vector.broadcast %cst_122 : f32 to vector<8x32xf32>
    %343 = arith.mulf %342, %341 : vector<8x32xf32>
    %cst_123 = arith.constant 1.000000e+00 : f32
    %344 = vector.broadcast %cst_123 : f32 to vector<8x32xf32>
    %345 = arith.subf %343, %344 : vector<8x32xf32>
    %346 = vector.extract_strided_slice %338 {offsets = [0, 96], sizes = [8, 32], strides = [1, 1]} : vector<8x128xf32> to vector<8x32xf32>
    %347 = arith.mulf %340, %326 : vector<8x32xf32>
    %348 = arith.mulf %339, %345 : vector<8x32xf32>
    %349 = arith.addf %347, %348 : vector<8x32xf32>
    %350 = math.tanh %349 : vector<8x32xf32>
    %351 = arith.mulf %346, %350 : vector<8x32xf32>
    %c5_i32_124 = arith.constant 5 : i32
    %352 = arith.index_cast %c5_i32_124 : i32 to index
    %c0_125 = arith.constant 0 : index
    %c0_126 = arith.constant 0 : index
    %353 = vector.load %arg11[%352, %c0_125, %c0_126] : memref<8x8x128xf32, #tpu.memory_space<vmem>>, vector<1x8x128xf32>
    %354 = vector.shape_cast %353 : vector<1x8x128xf32> to vector<8x128xf32>
    %cst_127 = arith.constant dense<0.000000e+00> : vector<8x128xf32>
    %355 = tpu.matmul %351, %228, %cst_127 {dimension_numbers = #tpu.dot_dimension_numbers<[1], [0], [0], [1], [0, 0, 1, 1], [], []>} : vector<8x32xf32>, vector<32x128xf32>, vector<8x128xf32> -> vector<8x128xf32>
    %356 = arith.addf %354, %355 : vector<8x128xf32>
    %357 = arith.negf %356 : vector<8x128xf32>
    %358 = math.exp %357 : vector<8x128xf32>
    %cst_128 = arith.constant 1.000000e+00 : f32
    %359 = vector.broadcast %cst_128 : f32 to vector<8x128xf32>
    %360 = arith.addf %359, %358 : vector<8x128xf32>
    %361 = arith.divf %359, %360 : vector<8x128xf32>
    %362 = vector.extract_strided_slice %361 {offsets = [0, 0], sizes = [8, 32], strides = [1, 1]} : vector<8x128xf32> to vector<8x32xf32>
    %363 = vector.extract_strided_slice %361 {offsets = [0, 32], sizes = [8, 32], strides = [1, 1]} : vector<8x128xf32> to vector<8x32xf32>
    %364 = vector.extract_strided_slice %361 {offsets = [0, 64], sizes = [8, 32], strides = [1, 1]} : vector<8x128xf32> to vector<8x32xf32>
    %cst_129 = arith.constant 2.000000e+00 : f32
    %365 = vector.broadcast %cst_129 : f32 to vector<8x32xf32>
    %366 = arith.mulf %365, %364 : vector<8x32xf32>
    %cst_130 = arith.constant 1.000000e+00 : f32
    %367 = vector.broadcast %cst_130 : f32 to vector<8x32xf32>
    %368 = arith.subf %366, %367 : vector<8x32xf32>
    %369 = vector.extract_strided_slice %361 {offsets = [0, 96], sizes = [8, 32], strides = [1, 1]} : vector<8x128xf32> to vector<8x32xf32>
    %370 = arith.mulf %363, %349 : vector<8x32xf32>
    %371 = arith.mulf %362, %368 : vector<8x32xf32>
    %372 = arith.addf %370, %371 : vector<8x32xf32>
    %373 = math.tanh %372 : vector<8x32xf32>
    %374 = arith.mulf %369, %373 : vector<8x32xf32>
    %c6_i32_131 = arith.constant 6 : i32
    %375 = arith.index_cast %c6_i32_131 : i32 to index
    %c0_132 = arith.constant 0 : index
    %c0_133 = arith.constant 0 : index
    %376 = vector.load %arg11[%375, %c0_132, %c0_133] : memref<8x8x128xf32, #tpu.memory_space<vmem>>, vector<1x8x128xf32>
    %377 = vector.shape_cast %376 : vector<1x8x128xf32> to vector<8x128xf32>
    %cst_134 = arith.constant dense<0.000000e+00> : vector<8x128xf32>
    %378 = tpu.matmul %374, %228, %cst_134 {dimension_numbers = #tpu.dot_dimension_numbers<[1], [0], [0], [1], [0, 0, 1, 1], [], []>} : vector<8x32xf32>, vector<32x128xf32>, vector<8x128xf32> -> vector<8x128xf32>
    %379 = arith.addf %377, %378 : vector<8x128xf32>
    %380 = arith.negf %379 : vector<8x128xf32>
    %381 = math.exp %380 : vector<8x128xf32>
    %cst_135 = arith.constant 1.000000e+00 : f32
    %382 = vector.broadcast %cst_135 : f32 to vector<8x128xf32>
    %383 = arith.addf %382, %381 : vector<8x128xf32>
    %384 = arith.divf %382, %383 : vector<8x128xf32>
    %385 = vector.extract_strided_slice %384 {offsets = [0, 0], sizes = [8, 32], strides = [1, 1]} : vector<8x128xf32> to vector<8x32xf32>
    %386 = vector.extract_strided_slice %384 {offsets = [0, 32], sizes = [8, 32], strides = [1, 1]} : vector<8x128xf32> to vector<8x32xf32>
    %387 = vector.extract_strided_slice %384 {offsets = [0, 64], sizes = [8, 32], strides = [1, 1]} : vector<8x128xf32> to vector<8x32xf32>
    %cst_136 = arith.constant 2.000000e+00 : f32
    %388 = vector.broadcast %cst_136 : f32 to vector<8x32xf32>
    %389 = arith.mulf %388, %387 : vector<8x32xf32>
    %cst_137 = arith.constant 1.000000e+00 : f32
    %390 = vector.broadcast %cst_137 : f32 to vector<8x32xf32>
    %391 = arith.subf %389, %390 : vector<8x32xf32>
    %392 = vector.extract_strided_slice %384 {offsets = [0, 96], sizes = [8, 32], strides = [1, 1]} : vector<8x128xf32> to vector<8x32xf32>
    %393 = arith.mulf %386, %372 : vector<8x32xf32>
    %394 = arith.mulf %385, %391 : vector<8x32xf32>
    %395 = arith.addf %393, %394 : vector<8x32xf32>
    %396 = math.tanh %395 : vector<8x32xf32>
    %397 = arith.mulf %392, %396 : vector<8x32xf32>
    %c7_i32_138 = arith.constant 7 : i32
    %398 = arith.index_cast %c7_i32_138 : i32 to index
    %c0_139 = arith.constant 0 : index
    %c0_140 = arith.constant 0 : index
    %399 = vector.load %arg11[%398, %c0_139, %c0_140] : memref<8x8x128xf32, #tpu.memory_space<vmem>>, vector<1x8x128xf32>
    %400 = vector.shape_cast %399 : vector<1x8x128xf32> to vector<8x128xf32>
    %cst_141 = arith.constant dense<0.000000e+00> : vector<8x128xf32>
    %401 = tpu.matmul %397, %228, %cst_141 {dimension_numbers = #tpu.dot_dimension_numbers<[1], [0], [0], [1], [0, 0, 1, 1], [], []>} : vector<8x32xf32>, vector<32x128xf32>, vector<8x128xf32> -> vector<8x128xf32>
    %402 = arith.addf %400, %401 : vector<8x128xf32>
    %403 = arith.negf %402 : vector<8x128xf32>
    %404 = math.exp %403 : vector<8x128xf32>
    %cst_142 = arith.constant 1.000000e+00 : f32
    %405 = vector.broadcast %cst_142 : f32 to vector<8x128xf32>
    %406 = arith.addf %405, %404 : vector<8x128xf32>
    %407 = arith.divf %405, %406 : vector<8x128xf32>
    %408 = vector.extract_strided_slice %407 {offsets = [0, 0], sizes = [8, 32], strides = [1, 1]} : vector<8x128xf32> to vector<8x32xf32>
    %409 = vector.extract_strided_slice %407 {offsets = [0, 32], sizes = [8, 32], strides = [1, 1]} : vector<8x128xf32> to vector<8x32xf32>
    %410 = vector.extract_strided_slice %407 {offsets = [0, 64], sizes = [8, 32], strides = [1, 1]} : vector<8x128xf32> to vector<8x32xf32>
    %cst_143 = arith.constant 2.000000e+00 : f32
    %411 = vector.broadcast %cst_143 : f32 to vector<8x32xf32>
    %412 = arith.mulf %411, %410 : vector<8x32xf32>
    %cst_144 = arith.constant 1.000000e+00 : f32
    %413 = vector.broadcast %cst_144 : f32 to vector<8x32xf32>
    %414 = arith.subf %412, %413 : vector<8x32xf32>
    %415 = vector.extract_strided_slice %407 {offsets = [0, 96], sizes = [8, 32], strides = [1, 1]} : vector<8x128xf32> to vector<8x32xf32>
    %416 = arith.mulf %409, %395 : vector<8x32xf32>
    %417 = arith.mulf %408, %414 : vector<8x32xf32>
    %418 = arith.addf %416, %417 : vector<8x32xf32>
    %419 = math.tanh %418 : vector<8x32xf32>
    %420 = arith.mulf %415, %419 : vector<8x32xf32>
    %c8_i32_145 = arith.constant 8 : i32
    %c0_146 = arith.constant 0 : index
    %c0_147 = arith.constant 0 : index
    %421 = vector.load %arg7[%c0_146, %c0_147] : memref<32x4xf32, #tpu.memory_space<vmem>>, vector<32x4xf32>
    %cst_148 = arith.constant dense<0.000000e+00> : vector<8x4xf32>
    %422 = tpu.matmul %420, %421, %cst_148 {dimension_numbers = #tpu.dot_dimension_numbers<[1], [0], [0], [1], [0, 0, 1, 1], [], []>} : vector<8x32xf32>, vector<32x4xf32>, vector<8x4xf32> -> vector<8x4xf32>
    %c0_149 = arith.constant 0 : index
    %c0_150 = arith.constant 0 : index
    %423 = vector.load %arg8[%c0_149, %c0_150] : memref<1x4xf32, #tpu.memory_space<vmem>>, vector<1x4xf32>
    %424 = vector.broadcast %423 : vector<1x4xf32> to vector<8x4xf32>
    %425 = arith.addf %422, %424 : vector<8x4xf32>
    %c0_151 = arith.constant 0 : index
    %c0_152 = arith.constant 0 : index
    %426 = vector.load %arg9[%c0_151, %c0_152] : memref<8x4xf32, #tpu.memory_space<vmem>>, vector<8x4xf32>
    tpu.vector_store %arg9[%c0_151, %c0_152], %425 {strides = array<i32>} : memref<8x4xf32, #tpu.memory_space<vmem>>, vector<8x4xf32>,
    return
  }
}

</mosaic_0001>

<llo_original>
// kernel: tpu_custom_call.1
$region0: #{tpu_custom_call.1}
  #allocation0 [shape = 'u32[]', space=smem, size = 0x4, offset = 0x4, fixed_abs, tag = 'smem constant byte address 0x4 - core index']
  #allocation1 [shape = 'u32[72,128]{1,0:T(1,128)}', space=vmem, size = 0x9000, scoped, tag = 'internal scratch']
  #allocation2 [shape = 'f32[8,8,32]{2,1,0:T(8,128)}', space=vmem, size = 0x8000, scoped, tag = 'scratch operand']
  #allocation3 [shape = 'f32[8,8,128]{2,1,0:T(8,128)}', space=vmem, size = 0x8000, scoped, tag = 'scratch operand']
  %s0 = inlined_call_operand.hbm [shape: f32[8,8,16], index: 0, kind: input, shape index: {}]
  %s1 = inlined_call_operand.hbm [shape: f32[16,128], index: 1, kind: input, shape index: {}]
  %s2 = inlined_call_operand.vmem [shape: f32[32,128], index: 2, kind: input, shape index: {}]
  %s3 = inlined_call_operand.vmem [shape: f32[1,128], index: 3, kind: input, shape index: {}]
  %s4 = inlined_call_operand.hbm [shape: f32[32,128], index: 4, kind: input, shape index: {}]
  %s5 = inlined_call_operand.hbm [shape: f32[32,128], index: 5, kind: input, shape index: {}]
  %s6 = inlined_call_operand.vmem [shape: f32[1,128], index: 6, kind: input, shape index: {}]
  %s7 = inlined_call_operand.vmem [shape: f32[32,4], index: 7, kind: input, shape index: {}]
  %s8 = inlined_call_operand.vmem [shape: f32[1,4], index: 8, kind: input, shape index: {}]
  %s9 = inlined_call_operand.vmem [shape: f32[8,4], index: 9, kind: output, shape index: {}]
  %s10 = sld [smem:[#allocation0]]
  $region62: #{tpu_custom_call.1} parent=0
    _
  %s12 = ssub.s32 1, %s10
  %s13 = scalar_select 0, %s12, %s10
  $region1: #{tpu_custom_call.1} parent=0
    #allocation4 [shape = 'u8[32768]{0}', space=vmem, size = 0x8000, scoped, tag = 'input window, operand 0, single buffered']
    #allocation5 [shape = 's32[1]{0}', space=sflag, size = 0x4, scoped, tag = 'scoped memory for tpu_custom_call.1']
    #allocation6 [shape = 'u8[8192]{0}', space=vmem, size = 0x2000, scoped, tag = 'input window, operand 1, single buffered']
    #allocation7 [shape = 's32[1]{0}', space=sflag, size = 0x4, scoped, tag = 'scoped memory for tpu_custom_call.1']
    #allocation8 [shape = 'u8[16384]{0}', space=vmem, size = 0x4000, scoped, tag = 'input window, operand 4, single buffered']
    #allocation9 [shape = 'u8[16384]{0}', space=vmem, size = 0x4000, scoped, tag = 'input window, operand 5, single buffered']
    #allocation10 [shape = 's32[1]{0}', space=sflag, size = 0x4, scoped, tag = 'scoped memory for tpu_custom_call.1']
    %14 = vsyncpa [#allocation5], 0
    %15 = vsyncpa [#allocation7], 0
    %16 = vsyncpa [#allocation10], 0
    // Predicated region
    $region2: #{tpu_custom_call.1} parent=1 // pred_check
      _
    $region3: #{tpu_custom_call.1} parent=1 // pred_check_branch
      %18 = sbr.rel (0) target = $region5
    $region4: #{tpu_custom_call.1} parent=1 // pred_region
      %20 = vsyncadd [#allocation5], 0
      %s21 = sshll.u32 %s0, 4
      %s22 = int_to_ptr.hbm [resolvable:$true] %s21
      %s23 = sshll.u32 [#allocation4], 4
      %s24 = int_to_ptr.vmem [resolvable:$true] %s23
      %29 = dma.hbm_to_vmem [thread:$0]  %s22, 1024, %s24, [#allocation5], 128, 128, 8
    $region5: #{tpu_custom_call.1} parent=1 // pred_fallthru
      _
    // Predicated region
    $region6: #{tpu_custom_call.1} parent=1 // pred_check
      _
    $region7: #{tpu_custom_call.1} parent=1 // pred_check_branch
      %31 = sbr.rel (0) target = $region9
    $region8: #{tpu_custom_call.1} parent=1 // pred_region
      %33 = vsyncadd [#allocation7], 0
      %s34 = sshll.u32 %s1, 4
      %s35 = int_to_ptr.hbm [resolvable:$true] %s34
      %s36 = sshll.u32 [#allocation6], 4
      %s37 = int_to_ptr.vmem [resolvable:$true] %s36
      %42 = dma.hbm_to_vmem [thread:$0]  %s35, 256, %s37, [#allocation7], 128, 128, 8
    $region9: #{tpu_custom_call.1} parent=1 // pred_fallthru
      _
    // Predicated region
    $region10: #{tpu_custom_call.1} parent=1 // pred_check
      _
    $region11: #{tpu_custom_call.1} parent=1 // pred_check_branch
      %44 = sbr.rel (0) target = $region13
    $region12: #{tpu_custom_call.1} parent=1 // pred_region
      _
    $region13: #{tpu_custom_call.1} parent=1 // pred_fallthru
      _
    // Predicated region
    $region14: #{tpu_custom_call.1} parent=1 // pred_check
      _
    $region15: #{tpu_custom_call.1} parent=1 // pred_check_branch
      %46 = sbr.rel (0) target = $region17
    $region16: #{tpu_custom_call.1} parent=1 // pred_region
      _
    $region17: #{tpu_custom_call.1} parent=1 // pred_fallthru
      _
    // Predicated region
    $region18: #{tpu_custom_call.1} parent=1 // pred_check
      _
    $region19: #{tpu_custom_call.1} parent=1 // pred_check_branch
      %48 = sbr.rel (0) target = $region21
    $region20: #{tpu_custom_call.1} parent=1 // pred_region
      %50 = vsyncadd [#allocation7], 0
      %s51 = sshll.u32 %s4, 4
      %s52 = int_to_ptr.hbm [resolvable:$true] %s51
      %s53 = sshll.u32 [#allocation8], 4
      %s54 = int_to_ptr.vmem [resolvable:$true] %s53
      %59 = dma.hbm_to_vmem [thread:$0]  %s52, 512, %s54, [#allocation7], 128, 128, 8
    $region21: #{tpu_custom_call.1} parent=1 // pred_fallthru
      _
    // Predicated region
    $region22: #{tpu_custom_call.1} parent=1 // pred_check
      _
    $region23: #{tpu_custom_call.1} parent=1 // pred_check_branch
      %61 = sbr.rel (0) target = $region25
    $region24: #{tpu_custom_call.1} parent=1 // pred_region
      %63 = vsyncadd [#allocation10], 0
      %s64 = sshll.u32 %s5, 4
      %s65 = int_to_ptr.hbm [resolvable:$true] %s64
      %s66 = sshll.u32 [#allocation9], 4
      %s67 = int_to_ptr.vmem [resolvable:$true] %s66
      %72 = dma.hbm_to_vmem [thread:$0]  %s65, 512, %s67, [#allocation10], 128, 128, 8
    $region25: #{tpu_custom_call.1} parent=1 // pred_fallthru
      _
    // Predicated region
    $region26: #{tpu_custom_call.1} parent=1 // pred_check
      _
    $region27: #{tpu_custom_call.1} parent=1 // pred_check_branch
      %74 = sbr.rel (0) target = $region29
    $region28: #{tpu_custom_call.1} parent=1 // pred_region
      _
    $region29: #{tpu_custom_call.1} parent=1 // pred_fallthru
      _
    // Predicated region
    $region30: #{tpu_custom_call.1} parent=1 // pred_check
      _
    $region31: #{tpu_custom_call.1} parent=1 // pred_check_branch
      %76 = sbr.rel (0) target = $region33
    $region32: #{tpu_custom_call.1} parent=1 // pred_region
      _
    $region33: #{tpu_custom_call.1} parent=1 // pred_fallthru
      _
    // Predicated region
    $region34: #{tpu_custom_call.1} parent=1 // pred_check
      _
    $region35: #{tpu_custom_call.1} parent=1 // pred_check_branch
      %78 = sbr.rel (0) target = $region37
    $region36: #{tpu_custom_call.1} parent=1 // pred_region
      _
    $region37: #{tpu_custom_call.1} parent=1 // pred_fallthru
      _
    // Predicated region
    $region38: #{tpu_custom_call.1} parent=1 // pred_check
      _
    $region39: #{tpu_custom_call.1} parent=1 // pred_check_branch
      %80 = sbr.rel (0) target = $region41
    $region40: #{tpu_custom_call.1} parent=1 // pred_region
      %82 = dma.done [#allocation5], 1024
    $region41: #{tpu_custom_call.1} parent=1 // pred_fallthru
      _
    // Predicated region
    $region42: #{tpu_custom_call.1} parent=1 // pred_check
      _
    $region43: #{tpu_custom_call.1} parent=1 // pred_check_branch
      %84 = sbr.rel (0) target = $region45
    $region44: #{tpu_custom_call.1} parent=1 // pred_region
      %86 = dma.done [#allocation7], 256
    $region45: #{tpu_custom_call.1} parent=1 // pred_fallthru
      _
    // Predicated region
    $region46: #{tpu_custom_call.1} parent=1 // pred_check
      _
    $region47: #{tpu_custom_call.1} parent=1 // pred_check_branch
      %88 = sbr.rel (0) target = $region49
    $region48: #{tpu_custom_call.1} parent=1 // pred_region
      %90 = dma.done [#allocation7], 512
    $region49: #{tpu_custom_call.1} parent=1 // pred_fallthru
      _
    // Predicated region
    $region50: #{tpu_custom_call.1} parent=1 // pred_check
      _
    $region51: #{tpu_custom_call.1} parent=1 // pred_check_branch
      %92 = sbr.rel (0) target = $region53
    $region52: #{tpu_custom_call.1} parent=1 // pred_region
      %94 = dma.done [#allocation10], 512
    $region53: #{tpu_custom_call.1} parent=1 // pred_fallthru
      _
    %v95 = vld [vmem:[#allocation6] sm:$0xff]
    %v96 = vld [vmem:[#allocation6 + $0x8] sm:$0xff]
    %v97 = vld [vmem:[%s2] sm:$0xff]
    %v98 = vld [vmem:[%s2 + $0x8] sm:$0xff]
    %v99 = vld [vmem:[%s2 + $0x10] sm:$0xff]
    %v100 = vld [vmem:[%s2 + $0x18] sm:$0xff]
    %v101 = vld [vmem:[%s3] sm:$0x1]
    %v102 = vld [vmem:[#allocation4] sm:$0xff]
    %v103 = vld [vmem:[#allocation4 + $0x8] sm:$0xff]
    %v104 = vld [vmem:[#allocation4 + $0x10] sm:$0xff]
    %v105 = vld [vmem:[#allocation4 + $0x18] sm:$0xff]
    %v106 = vld [vmem:[#allocation4 + $0x20] sm:$0xff]
    %v107 = vld [vmem:[#allocation4 + $0x28] sm:$0xff]
    %v108 = vld [vmem:[#allocation4 + $0x30] sm:$0xff]
    %v109 = vld [vmem:[#allocation4 + $0x38] sm:$0xff]
    %v111 = vperm.slane %v101, 0
    %vm113 = vcmask 130048
    %v115 = vsel %vm113, %v102, 0
    %v118 = vsel %vm113, %v103, 0
    %v121 = vsel %vm113, %v104, 0
    %v124 = vsel %vm113, %v105, 0
    %v127 = vsel %vm113, %v106, 0
    %v130 = vsel %vm113, %v107, 0
    %v133 = vsel %vm113, %v108, 0
    %v136 = vsel %vm113, %v109, 0
    %138 = vmatpush.msra.mxu0 0.0
    %139 = vmatpush.msra.mxu0 0.0
    %140 = vmatpush.msra.mxu0 0.0
    %141 = vmatpush.msra.mxu0 0.0
    %142 = vmatpush.msra.mxu0 0.0
    %143 = vmatpush.msra.mxu0 0.0
    %144 = vmatpush.msra.mxu0 0.0
    %145 = vmatpush.msra.mxu0 0.0
    %146 = vmatpush.msra.mxu0 0.0
    %147 = vmatpush.msra.mxu0 0.0
    %148 = vmatpush.msra.mxu0 0.0
    %149 = vmatpush.msra.mxu0 0.0
    %150 = vmatpush.msra.mxu0 0.0
    %151 = vmatpush.msra.mxu0 0.0
    %152 = vmatpush.msra.mxu0 %v96
    %153 = vmatpush.msra.mxu0 %v95
    %154 = vmatmul.f32.gmra.mxu0 %v115
    %v155 = vpop.f32.mrf.mxu0
    %v156 = vadd.f32 %v111, %v155
    %157 = vmatmul.f32.gmra.mxu0 %v118
    %v158 = vpop.f32.mrf.mxu0
    %v159 = vadd.f32 %v111, %v158
    %160 = vmatmul.f32.gmra.mxu0 %v121
    %v161 = vpop.f32.mrf.mxu0
    %v162 = vadd.f32 %v111, %v161
    %163 = vmatmul.f32.gmra.mxu0 %v124
    %v164 = vpop.f32.mrf.mxu0
    %v165 = vadd.f32 %v111, %v164
    %166 = vmatmul.f32.gmra.mxu0 %v127
    %v167 = vpop.f32.mrf.mxu0
    %v168 = vadd.f32 %v111, %v167
    %169 = vmatmul.f32.gmra.mxu0 %v130
    %v170 = vpop.f32.mrf.mxu0
    %v171 = vadd.f32 %v111, %v170
    %172 = vmatmul.f32.gmra.mxu0 %v133
    %v173 = vpop.f32.mrf.mxu0
    %v174 = vadd.f32 %v111, %v173
    %175 = vmatmul.f32.gmra.mxu0 %v136
    %v176 = vpop.f32.mrf.mxu0
    %v177 = vadd.f32 %v111, %v176
    %178 = vdwg.mxu0
    %179 = vst [vmem:[#allocation3] sm:$0xff] %v156
    %180 = vst [vmem:[#allocation3 + $0x8] sm:$0xff] %v159
    %181 = vst [vmem:[#allocation3 + $0x10] sm:$0xff] %v162
    %182 = vst [vmem:[#allocation3 + $0x18] sm:$0xff] %v165
    %183 = vst [vmem:[#allocation3 + $0x20] sm:$0xff] %v168
    %184 = vst [vmem:[#allocation3 + $0x28] sm:$0xff] %v171
    %185 = vst [vmem:[#allocation3 + $0x30] sm:$0xff] %v174
    %186 = vst [vmem:[#allocation3 + $0x38] sm:$0xff] %v177
    %v187 = vld [vmem:[#allocation3] sm:$0xff]
    %vm188 = vcmask 261120
    %v190 = vsel %vm188, 0.0, 0
    %192 = vmatpush.msra.mxu0 0.0
    %193 = vmatpush.msra.mxu0 0.0
    %194 = vmatpush.msra.mxu0 0.0
    %195 = vmatpush.msra.mxu0 0.0
    %196 = vmatpush.msra.mxu0 0.0
    %197 = vmatpush.msra.mxu0 0.0
    %198 = vmatpush.msra.mxu0 0.0
    %199 = vmatpush.msra.mxu0 0.0
    %200 = vmatpush.msra.mxu0 0.0
    %201 = vmatpush.msra.mxu0 0.0
    %202 = vmatpush.msra.mxu0 0.0
    %203 = vmatpush.msra.mxu0 0.0
    %204 = vmatpush.msra.mxu0 %v100
    %205 = vmatpush.msra.mxu0 %v99
    %206 = vmatpush.msra.mxu0 %v98
    %207 = vmatpush.msra.mxu0 %v97
    %208 = vmatmul.f32.gmra.mxu0 %v190
    %v209 = vpop.f32.mrf.mxu0
    %v210 = vadd.f32 0.0, %v209
    %211 = vdwg.mxu0
    %v212 = vadd.f32 %v187, %v210
    %v213 = vxor.u32 %v212, 2147483648
    %v214 = vmul.f32 %v213, 1.442695
    %v215 = vpow.pop %v214
    %v216 = vadd.f32 %v215, 1.0
    %v217 = vrcp.pop %v216
    %v218 = vmul.f32 %v216, %v217
    %v219 = vsub.f32 1.0, %v218
    %v220 = vmul.f32 %v217, %v219
    %v221 = vadd.f32 %v217, %v220
    %vm222 = vweird.f32 %v216
    %vm223 = vweird.f32 %v217
    %vm224 = vmor %vm222, %vm223
    %v225 = vsel %vm224, %v217, %v221
    %v226 = vand.u32 2147483647, %v216
    %vm227 = vcmp.eq.f32.partialorder %v226, 8.507059e+37
    %v228 = vand.u32 %v216, 2147483648
    %v229 = vor.u32 1.1754944e-38, %v228
    %v230 = vsel %vm227, %v229, %v225
    %v231 = vmul.f32 1.0, %v230
    %v232 = vmul.f32 %v231, 2.0
    %v233 = vsub.f32 %v232, 1.0
    %v234 = vmul.f32 %v231, 0.0
    %236 = vrot.lane.b32.xlu0 %v233, 64
    %v237 = vpop.permute.xlu0 %236
    %v239 = vmul.f32 %v231, %v237
    %241 = vrot.lane.b32.xlu0 %v239, 32
    %v242 = vpop.permute.xlu0 %241
    %v244 = vadd.f32 %v234, %v242
    %v245 = vtanh.pop %v244
    %247 = vrot.lane.b32.xlu0 %v245, 64
    %v248 = vpop.permute.xlu0 %247
    %v250 = vmul.f32 %v231, %v248
    %252 = vrot.lane.b32.xlu0 %v250, 32
    %v253 = vpop.permute.xlu0 %252
    %255 = vst.msk [vmem:[#allocation2] sm:$0xff] %vm188, %v253
    %s256 = scalar_lea.vmem [#allocation3], 8
    %v257 = vld [vmem:[%s256] sm:$0xff]
    %v258 = vsel %vm188, %v253, 0
    %260 = vmatpush.msra.mxu0 0.0
    %261 = vmatpush.msra.mxu0 0.0
    %262 = vmatpush.msra.mxu0 0.0
    %263 = vmatpush.msra.mxu0 0.0
    %264 = vmatpush.msra.mxu0 0.0
    %265 = vmatpush.msra.mxu0 0.0
    %266 = vmatpush.msra.mxu0 0.0
    %267 = vmatpush.msra.mxu0 0.0
    %268 = vmatpush.msra.mxu0 0.0
    %269 = vmatpush.msra.mxu0 0.0
    %270 = vmatpush.msra.mxu0 0.0
    %271 = vmatpush.msra.mxu0 0.0
    %272 = vmatpush.msra.mxu0 %v100
    %273 = vmatpush.msra.mxu0 %v99
    %274 = vmatpush.msra.mxu0 %v98
    %275 = vmatpush.msra.mxu0 %v97
    %276 = vmatmul.f32.gmra.mxu0 %v258
    %v277 = vpop.f32.mrf.mxu0
    %v278 = vadd.f32 0.0, %v277
    %279 = vdwg.mxu0
    %v280 = vadd.f32 %v257, %v278
    %v281 = vxor.u32 %v280, 2147483648
    %v282 = vmul.f32 %v281, 1.442695
    %v283 = vpow.pop %v282
    %v284 = vadd.f32 %v283, 1.0
    %v285 = vrcp.pop %v284
    %v286 = vmul.f32 %v284, %v285
    %v287 = vsub.f32 1.0, %v286
    %v288 = vmul.f32 %v285, %v287
    %v289 = vadd.f32 %v285, %v288
    %vm290 = vweird.f32 %v284
    %vm291 = vweird.f32 %v285
    %vm292 = vmor %vm290, %vm291
    %v293 = vsel %vm292, %v285, %v289
    %v294 = vand.u32 2147483647, %v284
    %vm295 = vcmp.eq.f32.partialorder %v294, 8.507059e+37
    %v296 = vand.u32 %v284, 2147483648
    %v297 = vor.u32 1.1754944e-38, %v296
    %v298 = vsel %vm295, %v297, %v293
    %v299 = vmul.f32 1.0, %v298
    %v300 = vmul.f32 %v299, 2.0
    %v301 = vsub.f32 %v300, 1.0
    %v302 = vmul.f32 %v299, %v244
    %304 = vrot.lane.b32.xlu0 %v301, 64
    %v305 = vpop.permute.xlu0 %304
    %v307 = vmul.f32 %v299, %v305
    %309 = vrot.lane.b32.xlu0 %v307, 32
    %v310 = vpop.permute.xlu0 %309
    %v312 = vadd.f32 %v302, %v310
    %v313 = vtanh.pop %v312
    %315 = vrot.lane.b32.xlu0 %v313, 64
    %v316 = vpop.permute.xlu0 %315
    %v318 = vmul.f32 %v299, %v316
    %320 = vrot.lane.b32.xlu0 %v318, 32
    %v321 = vpop.permute.xlu0 %320
    %s323 = scalar_lea.vmem [#allocation2], 8
    %324 = vst.msk [vmem:[%s323] sm:$0xff] %vm188, %v321
    %s325 = scalar_lea.vmem [#allocation3], 16
    %v326 = vld [vmem:[%s325] sm:$0xff]
    %v327 = vsel %vm188, %v321, 0
    %329 = vmatpush.msra.mxu0 0.0
    %330 = vmatpush.msra.mxu0 0.0
    %331 = vmatpush.msra.mxu0 0.0
    %332 = vmatpush.msra.mxu0 0.0
    %333 = vmatpush.msra.mxu0 0.0
    %334 = vmatpush.msra.mxu0 0.0
    %335 = vmatpush.msra.mxu0 0.0
    %336 = vmatpush.msra.mxu0 0.0
    %337 = vmatpush.msra.mxu0 0.0
    %338 = vmatpush.msra.mxu0 0.0
    %339 = vmatpush.msra.mxu0 0.0
    %340 = vmatpush.msra.mxu0 0.0
    %341 = vmatpush.msra.mxu0 %v100
    %342 = vmatpush.msra.mxu0 %v99
    %343 = vmatpush.msra.mxu0 %v98
    %344 = vmatpush.msra.mxu0 %v97
    %345 = vmatmul.f32.gmra.mxu0 %v327
    %v346 = vpop.f32.mrf.mxu0
    %v347 = vadd.f32 0.0, %v346
    %348 = vdwg.mxu0
    %v349 = vadd.f32 %v326, %v347
    %v350 = vxor.u32 %v349, 2147483648
    %v351 = vmul.f32 %v350, 1.442695
    %v352 = vpow.pop %v351
    %v353 = vadd.f32 %v352, 1.0
    %v354 = vrcp.pop %v353
    %v355 = vmul.f32 %v353, %v354
    %v356 = vsub.f32 1.0, %v355
    %v357 = vmul.f32 %v354, %v356
    %v358 = vadd.f32 %v354, %v357
    %vm359 = vweird.f32 %v353
    %vm360 = vweird.f32 %v354
    %vm361 = vmor %vm359, %vm360
    %v362 = vsel %vm361, %v354, %v358
    %v363 = vand.u32 2147483647, %v353
    %vm364 = vcmp.eq.f32.partialorder %v363, 8.507059e+37
    %v365 = vand.u32 %v353, 2147483648
    %v366 = vor.u32 1.1754944e-38, %v365
    %v367 = vsel %vm364, %v366, %v362
    %v368 = vmul.f32 1.0, %v367
    %v369 = vmul.f32 %v368, 2.0
    %v370 = vsub.f32 %v369, 1.0
    %v371 = vmul.f32 %v368, %v312
    %373 = vrot.lane.b32.xlu0 %v370, 64
    %v374 = vpop.permute.xlu0 %373
    %v376 = vmul.f32 %v368, %v374
    %378 = vrot.lane.b32.xlu0 %v376, 32
    %v379 = vpop.permute.xlu0 %378
    %v381 = vadd.f32 %v371, %v379
    %v382 = vtanh.pop %v381
    %384 = vrot.lane.b32.xlu0 %v382, 64
    %v385 = vpop.permute.xlu0 %384
    %v387 = vmul.f32 %v368, %v385
    %389 = vrot.lane.b32.xlu0 %v387, 32
    %v390 = vpop.permute.xlu0 %389
    %s392 = scalar_lea.vmem [#allocation2], 16
    %393 = vst.msk [vmem:[%s392] sm:$0xff] %vm188, %v390
    %s394 = scalar_lea.vmem [#allocation3], 24
    %v395 = vld [vmem:[%s394] sm:$0xff]
    %v396 = vsel %vm188, %v390, 0
    %398 = vmatpush.msra.mxu0 0.0
    %399 = vmatpush.msra.mxu0 0.0
    %400 = vmatpush.msra.mxu0 0.0
    %401 = vmatpush.msra.mxu0 0.0
    %402 = vmatpush.msra.mxu0 0.0
    %403 = vmatpush.msra.mxu0 0.0
    %404 = vmatpush.msra.mxu0 0.0
    %405 = vmatpush.msra.mxu0 0.0
    %406 = vmatpush.msra.mxu0 0.0
    %407 = vmatpush.msra.mxu0 0.0
    %408 = vmatpush.msra.mxu0 0.0
    %409 = vmatpush.msra.mxu0 0.0
    %410 = vmatpush.msra.mxu0 %v100
    %411 = vmatpush.msra.mxu0 %v99
    %412 = vmatpush.msra.mxu0 %v98
    %413 = vmatpush.msra.mxu0 %v97
    %414 = vmatmul.f32.gmra.mxu0 %v396
    %v415 = vpop.f32.mrf.mxu0
    %v416 = vadd.f32 0.0, %v415
    %417 = vdwg.mxu0
    %v418 = vadd.f32 %v395, %v416
    %v419 = vxor.u32 %v418, 2147483648
    %v420 = vmul.f32 %v419, 1.442695
    %v421 = vpow.pop %v420
    %v422 = vadd.f32 %v421, 1.0
    %v423 = vrcp.pop %v422
    %v424 = vmul.f32 %v422, %v423
    %v425 = vsub.f32 1.0, %v424
    %v426 = vmul.f32 %v423, %v425
    %v427 = vadd.f32 %v423, %v426
    %vm428 = vweird.f32 %v422
    %vm429 = vweird.f32 %v423
    %vm430 = vmor %vm428, %vm429
    %v431 = vsel %vm430, %v423, %v427
    %v432 = vand.u32 2147483647, %v422
    %vm433 = vcmp.eq.f32.partialorder %v432, 8.507059e+37
    %v434 = vand.u32 %v422, 2147483648
    %v435 = vor.u32 1.1754944e-38, %v434
    %v436 = vsel %vm433, %v435, %v431
    %v437 = vmul.f32 1.0, %v436
    %v438 = vmul.f32 %v437, 2.0
    %v439 = vsub.f32 %v438, 1.0
    %v440 = vmul.f32 %v437, %v381
    %442 = vrot.lane.b32.xlu0 %v439, 64
    %v443 = vpop.permute.xlu0 %442
    %v445 = vmul.f32 %v437, %v443
    %447 = vrot.lane.b32.xlu0 %v445, 32
    %v448 = vpop.permute.xlu0 %447
    %v450 = vadd.f32 %v440, %v448
    %v451 = vtanh.pop %v450
    %453 = vrot.lane.b32.xlu0 %v451, 64
    %v454 = vpop.permute.xlu0 %453
    %v456 = vmul.f32 %v437, %v454
    %458 = vrot.lane.b32.xlu0 %v456, 32
    %v459 = vpop.permute.xlu0 %458
    %s461 = scalar_lea.vmem [#allocation2], 24
    %462 = vst.msk [vmem:[%s461] sm:$0xff] %vm188, %v459
    %s463 = scalar_lea.vmem [#allocation3], 32
    %v464 = vld [vmem:[%s463] sm:$0xff]
    %v465 = vsel %vm188, %v459, 0
    %467 = vmatpush.msra.mxu0 0.0
    %468 = vmatpush.msra.mxu0 0.0
    %469 = vmatpush.msra.mxu0 0.0
    %470 = vmatpush.msra.mxu0 0.0
    %471 = vmatpush.msra.mxu0 0.0
    %472 = vmatpush.msra.mxu0 0.0
    %473 = vmatpush.msra.mxu0 0.0
    %474 = vmatpush.msra.mxu0 0.0
    %475 = vmatpush.msra.mxu0 0.0
    %476 = vmatpush.msra.mxu0 0.0
    %477 = vmatpush.msra.mxu0 0.0
    %478 = vmatpush.msra.mxu0 0.0
    %479 = vmatpush.msra.mxu0 %v100
    %480 = vmatpush.msra.mxu0 %v99
    %481 = vmatpush.msra.mxu0 %v98
    %482 = vmatpush.msra.mxu0 %v97
    %483 = vmatmul.f32.gmra.mxu0 %v465
    %v484 = vpop.f32.mrf.mxu0
    %v485 = vadd.f32 0.0, %v484
    %486 = vdwg.mxu0
    %v487 = vadd.f32 %v464, %v485
    %v488 = vxor.u32 %v487, 2147483648
    %v489 = vmul.f32 %v488, 1.442695
    %v490 = vpow.pop %v489
    %v491 = vadd.f32 %v490, 1.0
    %v492 = vrcp.pop %v491
    %v493 = vmul.f32 %v491, %v492
    %v494 = vsub.f32 1.0, %v493
    %v495 = vmul.f32 %v492, %v494
    %v496 = vadd.f32 %v492, %v495
    %vm497 = vweird.f32 %v491
    %vm498 = vweird.f32 %v492
    %vm499 = vmor %vm497, %vm498
    %v500 = vsel %vm499, %v492, %v496
    %v501 = vand.u32 2147483647, %v491
    %vm502 = vcmp.eq.f32.partialorder %v501, 8.507059e+37
    %v503 = vand.u32 %v491, 2147483648
    %v504 = vor.u32 1.1754944e-38, %v503
    %v505 = vsel %vm502, %v504, %v500
    %v506 = vmul.f32 1.0, %v505
    %v507 = vmul.f32 %v506, 2.0
    %v508 = vsub.f32 %v507, 1.0
    %v509 = vmul.f32 %v506, %v450
    %511 = vrot.lane.b32.xlu0 %v508, 64
    %v512 = vpop.permute.xlu0 %511
    %v514 = vmul.f32 %v506, %v512
    %516 = vrot.lane.b32.xlu0 %v514, 32
    %v517 = vpop.permute.xlu0 %516
    %v519 = vadd.f32 %v509, %v517
    %v520 = vtanh.pop %v519
    %522 = vrot.lane.b32.xlu0 %v520, 64
    %v523 = vpop.permute.xlu0 %522
    %v525 = vmul.f32 %v506, %v523
    %527 = vrot.lane.b32.xlu0 %v525, 32
    %v528 = vpop.permute.xlu0 %527
    %s530 = scalar_lea.vmem [#allocation2], 32
    %531 = vst.msk [vmem:[%s530] sm:$0xff] %vm188, %v528
    %s532 = scalar_lea.vmem [#allocation3], 40
    %v533 = vld [vmem:[%s532] sm:$0xff]
    %v534 = vsel %vm188, %v528, 0
    %536 = vmatpush.msra.mxu0 0.0
    %537 = vmatpush.msra.mxu0 0.0
    %538 = vmatpush.msra.mxu0 0.0
    %539 = vmatpush.msra.mxu0 0.0
    %540 = vmatpush.msra.mxu0 0.0
    %541 = vmatpush.msra.mxu0 0.0
    %542 = vmatpush.msra.mxu0 0.0
    %543 = vmatpush.msra.mxu0 0.0
    %544 = vmatpush.msra.mxu0 0.0
    %545 = vmatpush.msra.mxu0 0.0
    %546 = vmatpush.msra.mxu0 0.0
    %547 = vmatpush.msra.mxu0 0.0
    %548 = vmatpush.msra.mxu0 %v100
    %549 = vmatpush.msra.mxu0 %v99
    %550 = vmatpush.msra.mxu0 %v98
    %551 = vmatpush.msra.mxu0 %v97
    %552 = vmatmul.f32.gmra.mxu0 %v534
    %v553 = vpop.f32.mrf.mxu0
    %v554 = vadd.f32 0.0, %v553
    %555 = vdwg.mxu0
    %v556 = vadd.f32 %v533, %v554
    %v557 = vxor.u32 %v556, 2147483648
    %v558 = vmul.f32 %v557, 1.442695
    %v559 = vpow.pop %v558
    %v560 = vadd.f32 %v559, 1.0
    %v561 = vrcp.pop %v560
    %v562 = vmul.f32 %v560, %v561
    %v563 = vsub.f32 1.0, %v562
    %v564 = vmul.f32 %v561, %v563
    %v565 = vadd.f32 %v561, %v564
    %vm566 = vweird.f32 %v560
    %vm567 = vweird.f32 %v561
    %vm568 = vmor %vm566, %vm567
    %v569 = vsel %vm568, %v561, %v565
    %v570 = vand.u32 2147483647, %v560
    %vm571 = vcmp.eq.f32.partialorder %v570, 8.507059e+37
    %v572 = vand.u32 %v560, 2147483648
    %v573 = vor.u32 1.1754944e-38, %v572
    %v574 = vsel %vm571, %v573, %v569
    %v575 = vmul.f32 1.0, %v574
    %v576 = vmul.f32 %v575, 2.0
    %v577 = vsub.f32 %v576, 1.0
    %v578 = vmul.f32 %v575, %v519
    %580 = vrot.lane.b32.xlu0 %v577, 64
    %v581 = vpop.permute.xlu0 %580
    %v583 = vmul.f32 %v575, %v581
    %585 = vrot.lane.b32.xlu0 %v583, 32
    %v586 = vpop.permute.xlu0 %585
    %v588 = vadd.f32 %v578, %v586
    %v589 = vtanh.pop %v588
    %591 = vrot.lane.b32.xlu0 %v589, 64
    %v592 = vpop.permute.xlu0 %591
    %v594 = vmul.f32 %v575, %v592
    %596 = vrot.lane.b32.xlu0 %v594, 32
    %v597 = vpop.permute.xlu0 %596
    %s599 = scalar_lea.vmem [#allocation2], 40
    %600 = vst.msk [vmem:[%s599] sm:$0xff] %vm188, %v597
    %s601 = scalar_lea.vmem [#allocation3], 48
    %v602 = vld [vmem:[%s601] sm:$0xff]
    %v603 = vsel %vm188, %v597, 0
    %605 = vmatpush.msra.mxu0 0.0
    %606 = vmatpush.msra.mxu0 0.0
    %607 = vmatpush.msra.mxu0 0.0
    %608 = vmatpush.msra.mxu0 0.0
    %609 = vmatpush.msra.mxu0 0.0
    %610 = vmatpush.msra.mxu0 0.0
    %611 = vmatpush.msra.mxu0 0.0
    %612 = vmatpush.msra.mxu0 0.0
    %613 = vmatpush.msra.mxu0 0.0
    %614 = vmatpush.msra.mxu0 0.0
    %615 = vmatpush.msra.mxu0 0.0
    %616 = vmatpush.msra.mxu0 0.0
    %617 = vmatpush.msra.mxu0 %v100
    %618 = vmatpush.msra.mxu0 %v99
    %619 = vmatpush.msra.mxu0 %v98
    %620 = vmatpush.msra.mxu0 %v97
    %621 = vmatmul.f32.gmra.mxu0 %v603
    %v622 = vpop.f32.mrf.mxu0
    %v623 = vadd.f32 0.0, %v622
    %624 = vdwg.mxu0
    %v625 = vadd.f32 %v602, %v623
    %v626 = vxor.u32 %v625, 2147483648
    %v627 = vmul.f32 %v626, 1.442695
    %v628 = vpow.pop %v627
    %v629 = vadd.f32 %v628, 1.0
    %v630 = vrcp.pop %v629
    %v631 = vmul.f32 %v629, %v630
    %v632 = vsub.f32 1.0, %v631
    %v633 = vmul.f32 %v630, %v632
    %v634 = vadd.f32 %v630, %v633
    %vm635 = vweird.f32 %v629
    %vm636 = vweird.f32 %v630
    %vm637 = vmor %vm635, %vm636
    %v638 = vsel %vm637, %v630, %v634
    %v639 = vand.u32 2147483647, %v629
    %vm640 = vcmp.eq.f32.partialorder %v639, 8.507059e+37
    %v641 = vand.u32 %v629, 2147483648
    %v642 = vor.u32 1.1754944e-38, %v641
    %v643 = vsel %vm640, %v642, %v638
    %v644 = vmul.f32 1.0, %v643
    %v645 = vmul.f32 %v644, 2.0
    %v646 = vsub.f32 %v645, 1.0
    %v647 = vmul.f32 %v644, %v588
    %649 = vrot.lane.b32.xlu0 %v646, 64
    %v650 = vpop.permute.xlu0 %649
    %v652 = vmul.f32 %v644, %v650
    %654 = vrot.lane.b32.xlu0 %v652, 32
    %v655 = vpop.permute.xlu0 %654
    %v657 = vadd.f32 %v647, %v655
    %v658 = vtanh.pop %v657
    %660 = vrot.lane.b32.xlu0 %v658, 64
    %v661 = vpop.permute.xlu0 %660
    %v663 = vmul.f32 %v644, %v661
    %665 = vrot.lane.b32.xlu0 %v663, 32
    %v666 = vpop.permute.xlu0 %665
    %s668 = scalar_lea.vmem [#allocation2], 48
    %669 = vst.msk [vmem:[%s668] sm:$0xff] %vm188, %v666
    %s670 = scalar_lea.vmem [#allocation3], 56
    %v671 = vld [vmem:[%s670] sm:$0xff]
    %v672 = vsel %vm188, %v666, 0
    %674 = vmatpush.msra.mxu0 0.0
    %675 = vmatpush.msra.mxu0 0.0
    %676 = vmatpush.msra.mxu0 0.0
    %677 = vmatpush.msra.mxu0 0.0
    %678 = vmatpush.msra.mxu0 0.0
    %679 = vmatpush.msra.mxu0 0.0
    %680 = vmatpush.msra.mxu0 0.0
    %681 = vmatpush.msra.mxu0 0.0
    %682 = vmatpush.msra.mxu0 0.0
    %683 = vmatpush.msra.mxu0 0.0
    %684 = vmatpush.msra.mxu0 0.0
    %685 = vmatpush.msra.mxu0 0.0
    %686 = vmatpush.msra.mxu0 %v100
    %687 = vmatpush.msra.mxu0 %v99
    %688 = vmatpush.msra.mxu0 %v98
    %689 = vmatpush.msra.mxu0 %v97
    %690 = vmatmul.f32.gmra.mxu0 %v672
    %v691 = vpop.f32.mrf.mxu0
    %v692 = vadd.f32 0.0, %v691
    %693 = vdwg.mxu0
    %v694 = vadd.f32 %v671, %v692
    %v695 = vxor.u32 %v694, 2147483648
    %v696 = vmul.f32 %v695, 1.442695
    %v697 = vpow.pop %v696
    %v698 = vadd.f32 %v697, 1.0
    %v699 = vrcp.pop %v698
    %v700 = vmul.f32 %v698, %v699
    %v701 = vsub.f32 1.0, %v700
    %v702 = vmul.f32 %v699, %v701
    %v703 = vadd.f32 %v699, %v702
    %vm704 = vweird.f32 %v698
    %vm705 = vweird.f32 %v699
    %vm706 = vmor %vm704, %vm705
    %v707 = vsel %vm706, %v699, %v703
    %v708 = vand.u32 2147483647, %v698
    %vm709 = vcmp.eq.f32.partialorder %v708, 8.507059e+37
    %v710 = vand.u32 %v698, 2147483648
    %v711 = vor.u32 1.1754944e-38, %v710
    %v712 = vsel %vm709, %v711, %v707
    %v713 = vmul.f32 1.0, %v712
    %v714 = vmul.f32 %v713, 2.0
    %v715 = vsub.f32 %v714, 1.0
    %v716 = vmul.f32 %v713, %v657
    %718 = vrot.lane.b32.xlu0 %v715, 64
    %v719 = vpop.permute.xlu0 %718
    %v721 = vmul.f32 %v713, %v719
    %723 = vrot.lane.b32.xlu0 %v721, 32
    %v724 = vpop.permute.xlu0 %723
    %v726 = vadd.f32 %v716, %v724
    %v727 = vtanh.pop %v726
    %729 = vrot.lane.b32.xlu0 %v727, 64
    %v730 = vpop.permute.xlu0 %729
    %v732 = vmul.f32 %v713, %v730
    %734 = vrot.lane.b32.xlu0 %v732, 32
    %v735 = vpop.permute.xlu0 %734
    %s737 = scalar_lea.vmem [#allocation2], 56
    %738 = vst.msk [vmem:[%s737] sm:$0xff] %vm188, %v735
    %v739 = vld [vmem:[#allocation8] sm:$0xff]
    %v740 = vld [vmem:[#allocation8 + $0x8] sm:$0xff]
    %v741 = vld [vmem:[#allocation8 + $0x10] sm:$0xff]
    %v742 = vld [vmem:[#allocation8 + $0x18] sm:$0xff]
    %v743 = vld [vmem:[#allocation9] sm:$0xff]
    %v744 = vld [vmem:[#allocation9 + $0x8] sm:$0xff]
    %v745 = vld [vmem:[#allocation9 + $0x10] sm:$0xff]
    %v746 = vld [vmem:[#allocation9 + $0x18] sm:$0xff]
    %v747 = vld [vmem:[%s6] sm:$0x1]
    %v748 = vld [vmem:[#allocation2] sm:$0xff]
    %v749 = vld [vmem:[#allocation2 + $0x8] sm:$0xff]
    %v750 = vld [vmem:[#allocation2 + $0x10] sm:$0xff]
    %v751 = vld [vmem:[#allocation2 + $0x18] sm:$0xff]
    %v752 = vld [vmem:[#allocation2 + $0x20] sm:$0xff]
    %v753 = vld [vmem:[#allocation2 + $0x28] sm:$0xff]
    %v754 = vld [vmem:[#allocation2 + $0x30] sm:$0xff]
    %v755 = vld [vmem:[#allocation2 + $0x38] sm:$0xff]
    %v757 = vperm.slane %v747, 0
    %v760 = vsel %vm188, %v748, 0
    %v763 = vsel %vm188, %v749, 0
    %v766 = vsel %vm188, %v750, 0
    %v769 = vsel %vm188, %v751, 0
    %v772 = vsel %vm188, %v752, 0
    %v775 = vsel %vm188, %v753, 0
    %v778 = vsel %vm188, %v754, 0
    %v781 = vsel %vm188, %v755, 0
    %783 = vmatpush.msra.mxu0 0.0
    %784 = vmatpush.msra.mxu0 0.0
    %785 = vmatpush.msra.mxu0 0.0
    %786 = vmatpush.msra.mxu0 0.0
    %787 = vmatpush.msra.mxu0 0.0
    %788 = vmatpush.msra.mxu0 0.0
    %789 = vmatpush.msra.mxu0 0.0
    %790 = vmatpush.msra.mxu0 0.0
    %791 = vmatpush.msra.mxu0 0.0
    %792 = vmatpush.msra.mxu0 0.0
    %793 = vmatpush.msra.mxu0 0.0
    %794 = vmatpush.msra.mxu0 0.0
    %795 = vmatpush.msra.mxu0 %v742
    %796 = vmatpush.msra.mxu0 %v741
    %797 = vmatpush.msra.mxu0 %v740
    %798 = vmatpush.msra.mxu0 %v739
    %799 = vmatmul.f32.gmra.mxu0 %v760
    %v800 = vpop.f32.mrf.mxu0
    %v801 = vadd.f32 %v757, %v800
    %802 = vmatmul.f32.gmra.mxu0 %v763
    %v803 = vpop.f32.mrf.mxu0
    %v804 = vadd.f32 %v757, %v803
    %805 = vmatmul.f32.gmra.mxu0 %v766
    %v806 = vpop.f32.mrf.mxu0
    %v807 = vadd.f32 %v757, %v806
    %808 = vmatmul.f32.gmra.mxu0 %v769
    %v809 = vpop.f32.mrf.mxu0
    %v810 = vadd.f32 %v757, %v809
    %811 = vmatmul.f32.gmra.mxu0 %v772
    %v812 = vpop.f32.mrf.mxu0
    %v813 = vadd.f32 %v757, %v812
    %814 = vmatmul.f32.gmra.mxu0 %v775
    %v815 = vpop.f32.mrf.mxu0
    %v816 = vadd.f32 %v757, %v815
    %817 = vmatmul.f32.gmra.mxu0 %v778
    %v818 = vpop.f32.mrf.mxu0
    %v819 = vadd.f32 %v757, %v818
    %820 = vmatmul.f32.gmra.mxu0 %v781
    %v821 = vpop.f32.mrf.mxu0
    %v822 = vadd.f32 %v757, %v821
    %823 = vdwg.mxu0
    %824 = vst [vmem:[#allocation3] sm:$0xff] %v801
    %825 = vst [vmem:[#allocation3 + $0x8] sm:$0xff] %v804
    %826 = vst [vmem:[#allocation3 + $0x10] sm:$0xff] %v807
    %827 = vst [vmem:[#allocation3 + $0x18] sm:$0xff] %v810
    %828 = vst [vmem:[#allocation3 + $0x20] sm:$0xff] %v813
    %829 = vst [vmem:[#allocation3 + $0x28] sm:$0xff] %v816
    %830 = vst [vmem:[#allocation3 + $0x30] sm:$0xff] %v819
    %831 = vst [vmem:[#allocation3 + $0x38] sm:$0xff] %v822
    %v832 = vld [vmem:[#allocation3] sm:$0xff]
    %833 = vmatpush.msra.mxu0 0.0
    %834 = vmatpush.msra.mxu0 0.0
    %835 = vmatpush.msra.mxu0 0.0
    %836 = vmatpush.msra.mxu0 0.0
    %837 = vmatpush.msra.mxu0 0.0
    %838 = vmatpush.msra.mxu0 0.0
    %839 = vmatpush.msra.mxu0 0.0
    %840 = vmatpush.msra.mxu0 0.0
    %841 = vmatpush.msra.mxu0 0.0
    %842 = vmatpush.msra.mxu0 0.0
    %843 = vmatpush.msra.mxu0 0.0
    %844 = vmatpush.msra.mxu0 0.0
    %845 = vmatpush.msra.mxu0 %v746
    %846 = vmatpush.msra.mxu0 %v745
    %847 = vmatpush.msra.mxu0 %v744
    %848 = vmatpush.msra.mxu0 %v743
    %849 = vmatmul.f32.gmra.mxu0 %v190
    %v850 = vpop.f32.mrf.mxu0
    %v851 = vadd.f32 0.0, %v850
    %852 = vdwg.mxu0
    %v853 = vadd.f32 %v832, %v851
    %v854 = vxor.u32 %v853, 2147483648
    %v855 = vmul.f32 %v854, 1.442695
    %v856 = vpow.pop %v855
    %v857 = vadd.f32 %v856, 1.0
    %v858 = vrcp.pop %v857
    %v859 = vmul.f32 %v857, %v858
    %v860 = vsub.f32 1.0, %v859
    %v861 = vmul.f32 %v858, %v860
    %v862 = vadd.f32 %v858, %v861
    %vm863 = vweird.f32 %v857
    %vm864 = vweird.f32 %v858
    %vm865 = vmor %vm863, %vm864
    %v866 = vsel %vm865, %v858, %v862
    %v867 = vand.u32 2147483647, %v857
    %vm868 = vcmp.eq.f32.partialorder %v867, 8.507059e+37
    %v869 = vand.u32 %v857, 2147483648
    %v870 = vor.u32 1.1754944e-38, %v869
    %v871 = vsel %vm868, %v870, %v866
    %v872 = vmul.f32 1.0, %v871
    %v873 = vmul.f32 %v872, 2.0
    %v874 = vsub.f32 %v873, 1.0
    %v875 = vmul.f32 %v872, 0.0
    %877 = vrot.lane.b32.xlu0 %v874, 64
    %v878 = vpop.permute.xlu0 %877
    %v880 = vmul.f32 %v872, %v878
    %882 = vrot.lane.b32.xlu0 %v880, 32
    %v883 = vpop.permute.xlu0 %882
    %v885 = vadd.f32 %v875, %v883
    %v886 = vtanh.pop %v885
    %888 = vrot.lane.b32.xlu0 %v886, 64
    %v889 = vpop.permute.xlu0 %888
    %v891 = vmul.f32 %v872, %v889
    %v892 = vld [vmem:[%s256] sm:$0xff]
    %894 = vrot.lane.b32.xlu0 %v891, 32
    %v895 = vpop.permute.xlu0 %894
    %v896 = vsel %vm188, %v895, 0
    %898 = vmatpush.msra.mxu0 0.0
    %899 = vmatpush.msra.mxu0 0.0
    %900 = vmatpush.msra.mxu0 0.0
    %901 = vmatpush.msra.mxu0 0.0
    %902 = vmatpush.msra.mxu0 0.0
    %903 = vmatpush.msra.mxu0 0.0
    %904 = vmatpush.msra.mxu0 0.0
    %905 = vmatpush.msra.mxu0 0.0
    %906 = vmatpush.msra.mxu0 0.0
    %907 = vmatpush.msra.mxu0 0.0
    %908 = vmatpush.msra.mxu0 0.0
    %909 = vmatpush.msra.mxu0 0.0
    %910 = vmatpush.msra.mxu0 %v746
    %911 = vmatpush.msra.mxu0 %v745
    %912 = vmatpush.msra.mxu0 %v744
    %913 = vmatpush.msra.mxu0 %v743
    %914 = vmatmul.f32.gmra.mxu0 %v896
    %v915 = vpop.f32.mrf.mxu0
    %v916 = vadd.f32 0.0, %v915
    %917 = vdwg.mxu0
    %v918 = vadd.f32 %v892, %v916
    %v919 = vxor.u32 %v918, 2147483648
    %v920 = vmul.f32 %v919, 1.442695
    %v921 = vpow.pop %v920
    %v922 = vadd.f32 %v921, 1.0
    %v923 = vrcp.pop %v922
    %v924 = vmul.f32 %v922, %v923
    %v925 = vsub.f32 1.0, %v924
    %v926 = vmul.f32 %v923, %v925
    %v927 = vadd.f32 %v923, %v926
    %vm928 = vweird.f32 %v922
    %vm929 = vweird.f32 %v923
    %vm930 = vmor %vm928, %vm929
    %v931 = vsel %vm930, %v923, %v927
    %v932 = vand.u32 2147483647, %v922
    %vm933 = vcmp.eq.f32.partialorder %v932, 8.507059e+37
    %v934 = vand.u32 %v922, 2147483648
    %v935 = vor.u32 1.1754944e-38, %v934
    %v936 = vsel %vm933, %v935, %v931
    %v937 = vmul.f32 1.0, %v936
    %v938 = vmul.f32 %v937, 2.0
    %v939 = vsub.f32 %v938, 1.0
    %v940 = vmul.f32 %v937, %v885
    %942 = vrot.lane.b32.xlu0 %v939, 64
    %v943 = vpop.permute.xlu0 %942
    %v945 = vmul.f32 %v937, %v943
    %947 = vrot.lane.b32.xlu0 %v945, 32
    %v948 = vpop.permute.xlu0 %947
    %v950 = vadd.f32 %v940, %v948
    %v951 = vtanh.pop %v950
    %953 = vrot.lane.b32.xlu0 %v951, 64
    %v954 = vpop.permute.xlu0 %953
    %v956 = vmul.f32 %v937, %v954
    %v957 = vld [vmem:[%s325] sm:$0xff]
    %959 = vrot.lane.b32.xlu0 %v956, 32
    %v960 = vpop.permute.xlu0 %959
    %v961 = vsel %vm188, %v960, 0
    %963 = vmatpush.msra.mxu0 0.0
    %964 = vmatpush.msra.mxu0 0.0
    %965 = vmatpush.msra.mxu0 0.0
    %966 = vmatpush.msra.mxu0 0.0
    %967 = vmatpush.msra.mxu0 0.0
    %968 = vmatpush.msra.mxu0 0.0
    %969 = vmatpush.msra.mxu0 0.0
    %970 = vmatpush.msra.mxu0 0.0
    %971 = vmatpush.msra.mxu0 0.0
    %972 = vmatpush.msra.mxu0 0.0
    %973 = vmatpush.msra.mxu0 0.0
    %974 = vmatpush.msra.mxu0 0.0
    %975 = vmatpush.msra.mxu0 %v746
    %976 = vmatpush.msra.mxu0 %v745
    %977 = vmatpush.msra.mxu0 %v744
    %978 = vmatpush.msra.mxu0 %v743
    %979 = vmatmul.f32.gmra.mxu0 %v961
    %v980 = vpop.f32.mrf.mxu0
    %v981 = vadd.f32 0.0, %v980
    %982 = vdwg.mxu0
    %v983 = vadd.f32 %v957, %v981
    %v984 = vxor.u32 %v983, 2147483648
    %v985 = vmul.f32 %v984, 1.442695
    %v986 = vpow.pop %v985
    %v987 = vadd.f32 %v986, 1.0
    %v988 = vrcp.pop %v987
    %v989 = vmul.f32 %v987, %v988
    %v990 = vsub.f32 1.0, %v989
    %v991 = vmul.f32 %v988, %v990
    %v992 = vadd.f32 %v988, %v991
    %vm993 = vweird.f32 %v987
    %vm994 = vweird.f32 %v988
    %vm995 = vmor %vm993, %vm994
    %v996 = vsel %vm995, %v988, %v992
    %v997 = vand.u32 2147483647, %v987
    %vm998 = vcmp.eq.f32.partialorder %v997, 8.507059e+37
    %v999 = vand.u32 %v987, 2147483648
    %v1000 = vor.u32 1.1754944e-38, %v999
    %v1001 = vsel %vm998, %v1000, %v996
    %v1002 = vmul.f32 1.0, %v1001
    %v1003 = vmul.f32 %v1002, 2.0
    %v1004 = vsub.f32 %v1003, 1.0
    %v1005 = vmul.f32 %v1002, %v950
    %1007 = vrot.lane.b32.xlu0 %v1004, 64
    %v1008 = vpop.permute.xlu0 %1007
    %v1010 = vmul.f32 %v1002, %v1008
    %1012 = vrot.lane.b32.xlu0 %v1010, 32
    %v1013 = vpop.permute.xlu0 %1012
    %v1015 = vadd.f32 %v1005, %v1013
    %v1016 = vtanh.pop %v1015
    %1018 = vrot.lane.b32.xlu0 %v1016, 64
    %v1019 = vpop.permute.xlu0 %1018
    %v1021 = vmul.f32 %v1002, %v1019
    %v1022 = vld [vmem:[%s394] sm:$0xff]
    %1024 = vrot.lane.b32.xlu0 %v1021, 32
    %v1025 = vpop.permute.xlu0 %1024
    %v1026 = vsel %vm188, %v1025, 0
    %1028 = vmatpush.msra.mxu0 0.0
    %1029 = vmatpush.msra.mxu0 0.0
    %1030 = vmatpush.msra.mxu0 0.0
    %1031 = vmatpush.msra.mxu0 0.0
    %1032 = vmatpush.msra.mxu0 0.0
    %1033 = vmatpush.msra.mxu0 0.0
    %1034 = vmatpush.msra.mxu0 0.0
    %1035 = vmatpush.msra.mxu0 0.0
    %1036 = vmatpush.msra.mxu0 0.0
    %1037 = vmatpush.msra.mxu0 0.0
    %1038 = vmatpush.msra.mxu0 0.0
    %1039 = vmatpush.msra.mxu0 0.0
    %1040 = vmatpush.msra.mxu0 %v746
    %1041 = vmatpush.msra.mxu0 %v745
    %1042 = vmatpush.msra.mxu0 %v744
    %1043 = vmatpush.msra.mxu0 %v743
    %1044 = vmatmul.f32.gmra.mxu0 %v1026
    %v1045 = vpop.f32.mrf.mxu0
    %v1046 = vadd.f32 0.0, %v1045
    %1047 = vdwg.mxu0
    %v1048 = vadd.f32 %v1022, %v1046
    %v1049 = vxor.u32 %v1048, 2147483648
    %v1050 = vmul.f32 %v1049, 1.442695
    %v1051 = vpow.pop %v1050
    %v1052 = vadd.f32 %v1051, 1.0
    %v1053 = vrcp.pop %v1052
    %v1054 = vmul.f32 %v1052, %v1053
    %v1055 = vsub.f32 1.0, %v1054
    %v1056 = vmul.f32 %v1053, %v1055
    %v1057 = vadd.f32 %v1053, %v1056
    %vm1058 = vweird.f32 %v1052
    %vm1059 = vweird.f32 %v1053
    %vm1060 = vmor %vm1058, %vm1059
    %v1061 = vsel %vm1060, %v1053, %v1057
    %v1062 = vand.u32 2147483647, %v1052
    %vm1063 = vcmp.eq.f32.partialorder %v1062, 8.507059e+37
    %v1064 = vand.u32 %v1052, 2147483648
    %v1065 = vor.u32 1.1754944e-38, %v1064
    %v1066 = vsel %vm1063, %v1065, %v1061
    %v1067 = vmul.f32 1.0, %v1066
    %v1068 = vmul.f32 %v1067, 2.0
    %v1069 = vsub.f32 %v1068, 1.0
    %v1070 = vmul.f32 %v1067, %v1015
    %1072 = vrot.lane.b32.xlu0 %v1069, 64
    %v1073 = vpop.permute.xlu0 %1072
    %v1075 = vmul.f32 %v1067, %v1073
    %1077 = vrot.lane.b32.xlu0 %v1075, 32
    %v1078 = vpop.permute.xlu0 %1077
    %v1080 = vadd.f32 %v1070, %v1078
    %v1081 = vtanh.pop %v1080
    %1083 = vrot.lane.b32.xlu0 %v1081, 64
    %v1084 = vpop.permute.xlu0 %1083
    %v1086 = vmul.f32 %v1067, %v1084
    %v1087 = vld [vmem:[%s463] sm:$0xff]
    %1089 = vrot.lane.b32.xlu0 %v1086, 32
    %v1090 = vpop.permute.xlu0 %1089
    %v1091 = vsel %vm188, %v1090, 0
    %1093 = vmatpush.msra.mxu0 0.0
    %1094 = vmatpush.msra.mxu0 0.0
    %1095 = vmatpush.msra.mxu0 0.0
    %1096 = vmatpush.msra.mxu0 0.0
    %1097 = vmatpush.msra.mxu0 0.0
    %1098 = vmatpush.msra.mxu0 0.0
    %1099 = vmatpush.msra.mxu0 0.0
    %1100 = vmatpush.msra.mxu0 0.0
    %1101 = vmatpush.msra.mxu0 0.0
    %1102 = vmatpush.msra.mxu0 0.0
    %1103 = vmatpush.msra.mxu0 0.0
    %1104 = vmatpush.msra.mxu0 0.0
    %1105 = vmatpush.msra.mxu0 %v746
    %1106 = vmatpush.msra.mxu0 %v745
    %1107 = vmatpush.msra.mxu0 %v744
    %1108 = vmatpush.msra.mxu0 %v743
    %1109 = vmatmul.f32.gmra.mxu0 %v1091
    %v1110 = vpop.f32.mrf.mxu0
    %v1111 = vadd.f32 0.0, %v1110
    %1112 = vdwg.mxu0
    %v1113 = vadd.f32 %v1087, %v1111
    %v1114 = vxor.u32 %v1113, 2147483648
    %v1115 = vmul.f32 %v1114, 1.442695
    %v1116 = vpow.pop %v1115
    %v1117 = vadd.f32 %v1116, 1.0
    %v1118 = vrcp.pop %v1117
    %v1119 = vmul.f32 %v1117, %v1118
    %v1120 = vsub.f32 1.0, %v1119
    %v1121 = vmul.f32 %v1118, %v1120
    %v1122 = vadd.f32 %v1118, %v1121
    %vm1123 = vweird.f32 %v1117
    %vm1124 = vweird.f32 %v1118
    %vm1125 = vmor %vm1123, %vm1124
    %v1126 = vsel %vm1125, %v1118, %v1122
    %v1127 = vand.u32 2147483647, %v1117
    %vm1128 = vcmp.eq.f32.partialorder %v1127, 8.507059e+37
    %v1129 = vand.u32 %v1117, 2147483648
    %v1130 = vor.u32 1.1754944e-38, %v1129
    %v1131 = vsel %vm1128, %v1130, %v1126
    %v1132 = vmul.f32 1.0, %v1131
    %v1133 = vmul.f32 %v1132, 2.0
    %v1134 = vsub.f32 %v1133, 1.0
    %v1135 = vmul.f32 %v1132, %v1080
    %1137 = vrot.lane.b32.xlu0 %v1134, 64
    %v1138 = vpop.permute.xlu0 %1137
    %v1140 = vmul.f32 %v1132, %v1138
    %1142 = vrot.lane.b32.xlu0 %v1140, 32
    %v1143 = vpop.permute.xlu0 %1142
    %v1145 = vadd.f32 %v1135, %v1143
    %v1146 = vtanh.pop %v1145
    %1148 = vrot.lane.b32.xlu0 %v1146, 64
    %v1149 = vpop.permute.xlu0 %1148
    %v1151 = vmul.f32 %v1132, %v1149
    %v1152 = vld [vmem:[%s532] sm:$0xff]
    %1154 = vrot.lane.b32.xlu0 %v1151, 32
    %v1155 = vpop.permute.xlu0 %1154
    %v1156 = vsel %vm188, %v1155, 0
    %1158 = vmatpush.msra.mxu0 0.0
    %1159 = vmatpush.msra.mxu0 0.0
    %1160 = vmatpush.msra.mxu0 0.0
    %1161 = vmatpush.msra.mxu0 0.0
    %1162 = vmatpush.msra.mxu0 0.0
    %1163 = vmatpush.msra.mxu0 0.0
    %1164 = vmatpush.msra.mxu0 0.0
    %1165 = vmatpush.msra.mxu0 0.0
    %1166 = vmatpush.msra.mxu0 0.0
    %1167 = vmatpush.msra.mxu0 0.0
    %1168 = vmatpush.msra.mxu0 0.0
    %1169 = vmatpush.msra.mxu0 0.0
    %1170 = vmatpush.msra.mxu0 %v746
    %1171 = vmatpush.msra.mxu0 %v745
    %1172 = vmatpush.msra.mxu0 %v744
    %1173 = vmatpush.msra.mxu0 %v743
    %1174 = vmatmul.f32.gmra.mxu0 %v1156
    %v1175 = vpop.f32.mrf.mxu0
    %v1176 = vadd.f32 0.0, %v1175
    %1177 = vdwg.mxu0
    %v1178 = vadd.f32 %v1152, %v1176
    %v1179 = vxor.u32 %v1178, 2147483648
    %v1180 = vmul.f32 %v1179, 1.442695
    %v1181 = vpow.pop %v1180
    %v1182 = vadd.f32 %v1181, 1.0
    %v1183 = vrcp.pop %v1182
    %v1184 = vmul.f32 %v1182, %v1183
    %v1185 = vsub.f32 1.0, %v1184
    %v1186 = vmul.f32 %v1183, %v1185
    %v1187 = vadd.f32 %v1183, %v1186
    %vm1188 = vweird.f32 %v1182
    %vm1189 = vweird.f32 %v1183
    %vm1190 = vmor %vm1188, %vm1189
    %v1191 = vsel %vm1190, %v1183, %v1187
    %v1192 = vand.u32 2147483647, %v1182
    %vm1193 = vcmp.eq.f32.partialorder %v1192, 8.507059e+37
    %v1194 = vand.u32 %v1182, 2147483648
    %v1195 = vor.u32 1.1754944e-38, %v1194
    %v1196 = vsel %vm1193, %v1195, %v1191
    %v1197 = vmul.f32 1.0, %v1196
    %v1198 = vmul.f32 %v1197, 2.0
    %v1199 = vsub.f32 %v1198, 1.0
    %v1200 = vmul.f32 %v1197, %v1145
    %1202 = vrot.lane.b32.xlu0 %v1199, 64
    %v1203 = vpop.permute.xlu0 %1202
    %v1205 = vmul.f32 %v1197, %v1203
    %1207 = vrot.lane.b32.xlu0 %v1205, 32
    %v1208 = vpop.permute.xlu0 %1207
    %v1210 = vadd.f32 %v1200, %v1208
    %v1211 = vtanh.pop %v1210
    %1213 = vrot.lane.b32.xlu0 %v1211, 64
    %v1214 = vpop.permute.xlu0 %1213
    %v1216 = vmul.f32 %v1197, %v1214
    %v1217 = vld [vmem:[%s601] sm:$0xff]
    %1219 = vrot.lane.b32.xlu0 %v1216, 32
    %v1220 = vpop.permute.xlu0 %1219
    %v1221 = vsel %vm188, %v1220, 0
    %1223 = vmatpush.msra.mxu0 0.0
    %1224 = vmatpush.msra.mxu0 0.0
    %1225 = vmatpush.msra.mxu0 0.0
    %1226 = vmatpush.msra.mxu0 0.0
    %1227 = vmatpush.msra.mxu0 0.0
    %1228 = vmatpush.msra.mxu0 0.0
    %1229 = vmatpush.msra.mxu0 0.0
    %1230 = vmatpush.msra.mxu0 0.0
    %1231 = vmatpush.msra.mxu0 0.0
    %1232 = vmatpush.msra.mxu0 0.0
    %1233 = vmatpush.msra.mxu0 0.0
    %1234 = vmatpush.msra.mxu0 0.0
    %1235 = vmatpush.msra.mxu0 %v746
    %1236 = vmatpush.msra.mxu0 %v745
    %1237 = vmatpush.msra.mxu0 %v744
    %1238 = vmatpush.msra.mxu0 %v743
    %1239 = vmatmul.f32.gmra.mxu0 %v1221
    %v1240 = vpop.f32.mrf.mxu0
    %v1241 = vadd.f32 0.0, %v1240
    %1242 = vdwg.mxu0
    %v1243 = vadd.f32 %v1217, %v1241
    %v1244 = vxor.u32 %v1243, 2147483648
    %v1245 = vmul.f32 %v1244, 1.442695
    %v1246 = vpow.pop %v1245
    %v1247 = vadd.f32 %v1246, 1.0
    %v1248 = vrcp.pop %v1247
    %v1249 = vmul.f32 %v1247, %v1248
    %v1250 = vsub.f32 1.0, %v1249
    %v1251 = vmul.f32 %v1248, %v1250
    %v1252 = vadd.f32 %v1248, %v1251
    %vm1253 = vweird.f32 %v1247
    %vm1254 = vweird.f32 %v1248
    %vm1255 = vmor %vm1253, %vm1254
    %v1256 = vsel %vm1255, %v1248, %v1252
    %v1257 = vand.u32 2147483647, %v1247
    %vm1258 = vcmp.eq.f32.partialorder %v1257, 8.507059e+37
    %v1259 = vand.u32 %v1247, 2147483648
    %v1260 = vor.u32 1.1754944e-38, %v1259
    %v1261 = vsel %vm1258, %v1260, %v1256
    %v1262 = vmul.f32 1.0, %v1261
    %v1263 = vmul.f32 %v1262, 2.0
    %v1264 = vsub.f32 %v1263, 1.0
    %v1265 = vmul.f32 %v1262, %v1210
    %1267 = vrot.lane.b32.xlu0 %v1264, 64
    %v1268 = vpop.permute.xlu0 %1267
    %v1270 = vmul.f32 %v1262, %v1268
    %1272 = vrot.lane.b32.xlu0 %v1270, 32
    %v1273 = vpop.permute.xlu0 %1272
    %v1275 = vadd.f32 %v1265, %v1273
    %v1276 = vtanh.pop %v1275
    %1278 = vrot.lane.b32.xlu0 %v1276, 64
    %v1279 = vpop.permute.xlu0 %1278
    %v1281 = vmul.f32 %v1262, %v1279
    %v1282 = vld [vmem:[%s670] sm:$0xff]
    %1284 = vrot.lane.b32.xlu0 %v1281, 32
    %v1285 = vpop.permute.xlu0 %1284
    %v1286 = vsel %vm188, %v1285, 0
    %1288 = vmatpush.msra.mxu0 0.0
    %1289 = vmatpush.msra.mxu0 0.0
    %1290 = vmatpush.msra.mxu0 0.0
    %1291 = vmatpush.msra.mxu0 0.0
    %1292 = vmatpush.msra.mxu0 0.0
    %1293 = vmatpush.msra.mxu0 0.0
    %1294 = vmatpush.msra.mxu0 0.0
    %1295 = vmatpush.msra.mxu0 0.0
    %1296 = vmatpush.msra.mxu0 0.0
    %1297 = vmatpush.msra.mxu0 0.0
    %1298 = vmatpush.msra.mxu0 0.0
    %1299 = vmatpush.msra.mxu0 0.0
    %1300 = vmatpush.msra.mxu0 %v746
    %1301 = vmatpush.msra.mxu0 %v745
    %1302 = vmatpush.msra.mxu0 %v744
    %1303 = vmatpush.msra.mxu0 %v743
    %1304 = vmatmul.f32.gmra.mxu0 %v1286
    %v1305 = vpop.f32.mrf.mxu0
    %v1306 = vadd.f32 0.0, %v1305
    %1307 = vdwg.mxu0
    %v1308 = vadd.f32 %v1282, %v1306
    %v1309 = vxor.u32 %v1308, 2147483648
    %v1310 = vmul.f32 %v1309, 1.442695
    %v1311 = vpow.pop %v1310
    %v1312 = vadd.f32 %v1311, 1.0
    %v1313 = vrcp.pop %v1312
    %v1314 = vmul.f32 %v1312, %v1313
    %v1315 = vsub.f32 1.0, %v1314
    %v1316 = vmul.f32 %v1313, %v1315
    %v1317 = vadd.f32 %v1313, %v1316
    %vm1318 = vweird.f32 %v1312
    %vm1319 = vweird.f32 %v1313
    %vm1320 = vmor %vm1318, %vm1319
    %v1321 = vsel %vm1320, %v1313, %v1317
    %v1322 = vand.u32 2147483647, %v1312
    %vm1323 = vcmp.eq.f32.partialorder %v1322, 8.507059e+37
    %v1324 = vand.u32 %v1312, 2147483648
    %v1325 = vor.u32 1.1754944e-38, %v1324
    %v1326 = vsel %vm1323, %v1325, %v1321
    %v1327 = vmul.f32 1.0, %v1326
    %v1328 = vmul.f32 %v1327, 2.0
    %v1329 = vsub.f32 %v1328, 1.0
    %v1330 = vmul.f32 %v1327, %v1275
    %1332 = vrot.lane.b32.xlu0 %v1329, 64
    %v1333 = vpop.permute.xlu0 %1332
    %v1335 = vmul.f32 %v1327, %v1333
    %1337 = vrot.lane.b32.xlu0 %v1335, 32
    %v1338 = vpop.permute.xlu0 %1337
    %v1340 = vadd.f32 %v1330, %v1338
    %v1341 = vtanh.pop %v1340
    %1343 = vrot.lane.b32.xlu0 %v1341, 64
    %v1344 = vpop.permute.xlu0 %1343
    %v1346 = vmul.f32 %v1327, %v1344
    %v1347 = vld [vmem:[%s7] sm:$0xff]
    %v1348 = vld [vmem:[%s7 + $0x8] sm:$0xff]
    %v1349 = vld [vmem:[%s7 + $0x10] sm:$0xff]
    %v1350 = vld [vmem:[%s7 + $0x18] sm:$0xff]
    %v1351 = vld [vmem:[%s8] sm:$0x1]
    %v1353 = vperm.slane %v1351, 0
    %1356 = vrot.lane.b32.xlu0 %v1346, 32
    %v1357 = vpop.permute.xlu0 %1356
    %v1358 = vsel %vm188, %v1357, 0
    %1360 = vmatpush.msra.mxu0 0.0
    %1361 = vmatpush.msra.mxu0 0.0
    %1362 = vmatpush.msra.mxu0 0.0
    %1363 = vmatpush.msra.mxu0 0.0
    %1364 = vmatpush.msra.mxu0 0.0
    %1365 = vmatpush.msra.mxu0 0.0
    %1366 = vmatpush.msra.mxu0 0.0
    %1367 = vmatpush.msra.mxu0 0.0
    %1368 = vmatpush.msra.mxu0 0.0
    %1369 = vmatpush.msra.mxu0 0.0
    %1370 = vmatpush.msra.mxu0 0.0
    %1371 = vmatpush.msra.mxu0 0.0
    %1372 = vmatpush.msra.mxu0 %v1350
    %1373 = vmatpush.msra.mxu0 %v1349
    %1374 = vmatpush.msra.mxu0 %v1348
    %1375 = vmatpush.msra.mxu0 %v1347
    %1376 = vmatmul.f32.gmra.mxu0 %v1358
    %v1377 = vpop.f32.mrf.mxu0
    %v1378 = vadd.f32 %v1353, %v1377
    %1379 = vdwg.mxu0
    %vm1380 = vcmask 31744
    %1381 = vst.msk [vmem:[%s9] sm:$0xff] %vm1380, %v1378
    // Predicated region
    $region54: #{tpu_custom_call.1} parent=1 // pred_check
      _
    $region55: #{tpu_custom_call.1} parent=1 // pred_check_branch
      %1383 = sbr.rel (0) target = $region57
    $region56: #{tpu_custom_call.1} parent=1 // pred_region
      _
    $region57: #{tpu_custom_call.1} parent=1 // pred_fallthru
      _
    // Predicated region
    $region58: #{tpu_custom_call.1} parent=1 // pred_check
      _
    $region59: #{tpu_custom_call.1} parent=1 // pred_check_branch
      %1385 = sbr.rel (0) target = $region61
    $region60: #{tpu_custom_call.1} parent=1 // pred_region
      _
    $region61: #{tpu_custom_call.1} parent=1 // pred_fallthru
      _
    %1386 = vsyncpa [#allocation5], 1
    %1387 = vsyncpa [#allocation7], 1
    %1388 = vsyncpa [#allocation10], 1

</llo_original>
